<compile_context>
chip_gen: v6e
topology: v6e:2x2x1
jax: 0.10.0
libtpu: 0.0.40
codegen_flags: <defaults>
</compile_context>

<pallas_src>
import jax
import jax.numpy as jnp
from jax.experimental import pallas as pl
from jax.experimental.pallas import tpu as pltpu


def se_block_kernel(s_ref, x_ref, w1_ref, b1_ref, w2_ref, b2_ref, w3_hbm,
                    o_ref, w3_vmem, dma_sem):
    # s_ref  : [1, C]     pooled vector (x194), f32
    # x_ref  : [C, HW]    feature map (x193), f32, channel-major (native NCHW view)
    # w1_ref : [C, Cmid]  conv2d62 weight^T, bf16 ; b1_ref: [1, Cmid] f32
    # w2_ref : [Cmid, C]  conv2d63 weight^T, bf16 ; b2_ref: [1, C]    f32
    # w3_hbm : [C, C]     conv2d64 weight (C_out, C_in), bf16, still in HBM
    # o_ref  : [C, HW]    output, f32
    # w3_vmem: [C, C] bf16 scratch ; dma_sem: DMA completion semaphore

    # Kick off the big weight transfer immediately so it overlaps the gate chain below.
    w3_copy = pltpu.make_async_copy(w3_hbm, w3_vmem, dma_sem)
    w3_copy.start()

    # Squeeze-excitation gate: two tiny M=1 bf16 matmuls (MXU) + ReLU (VPU) + sigmoid (EUP).
    h = jnp.dot(s_ref[...].astype(jnp.bfloat16), w1_ref[...],
                preferred_element_type=jnp.float32) + b1_ref[...]
    h = jnp.maximum(h, 0.0)                                           # ReLU
    g = jnp.dot(h.astype(jnp.bfloat16), w2_ref[...],
                preferred_element_type=jnp.float32) + b2_ref[...]
    gate = jax.nn.sigmoid(g)                                          # [1, C], f32

    # conv2d64(gate * x)  ==  (W64 * gate_row) @ x : fold the gate into W64's columns so the
    # gate never needs a lane->sublane transpose and x stays channel-major.
    w3_copy.wait()
    w3_gated = w3_vmem[...] * gate.astype(jnp.bfloat16)               # [C, C] bf16
    o_ref[...] = jnp.dot(w3_gated, x_ref[...].astype(jnp.bfloat16),
                         preferred_element_type=jnp.float32)


def se_block(x193, x194, w1, b1, w2, b2, w3):
    """x193: [N, C, H, W], x194: [N, C, 1, 1] (N must be 1). Returns [N, C, H, W] (f32)."""
    n, c, hgt, wid = x193.shape
    assert n == 1
    hw = hgt * wid
    x = x193.reshape(c, hw)          # free reshape, channel-major — no transpose
    s = x194.reshape(1, c)           # free reshape

    vmem = pl.BlockSpec(memory_space=pltpu.MemorySpace.VMEM)
    out = pl.pallas_call(
        se_block_kernel,
        out_shape=jax.ShapeDtypeStruct((c, hw), jnp.float32),
        in_specs=[vmem, vmem, vmem, vmem, vmem, vmem,
                  pl.BlockSpec(memory_space=pl.ANY)],     # w3: manual DMA from HBM
        out_specs=vmem,
        scratch_shapes=[pltpu.VMEM((c, c), jnp.bfloat16),
                        pltpu.SemaphoreType.DMA(())],
    )(s, x, w1, b1, w2, b2, w3)

    return out.reshape(n, c, hgt, wid)   # free reshape back to NCHW


if __name__ == "__main__":
    key = jax.random.PRNGKey(0)
    k = jax.random.split(key, 7)

    N, C, H, W = 1, 440, 7, 7
    CMID = 110

    # Inputs (as in the PyTorch module).
    x193 = jax.random.normal(k[0], (N, C, H, W), jnp.float32)
    x194 = jax.random.normal(k[1], (N, C, 1, 1), jnp.float32)

    # Parameters in PyTorch Conv2d layout.
    w62 = jax.random.normal(k[2], (CMID, C, 1, 1), jnp.float32) * 0.05   # conv2d62.weight
    b62 = jax.random.normal(k[3], (CMID,), jnp.float32) * 0.05           # conv2d62.bias
    w63 = jax.random.normal(k[4], (C, CMID, 1, 1), jnp.float32) * 0.05   # conv2d63.weight
    b63 = jax.random.normal(k[5], (C,), jnp.float32) * 0.05              # conv2d63.bias
    w64 = jax.random.normal(k[6], (C, C, 1, 1), jnp.float32) * 0.05      # conv2d64.weight (no bias)

    # One-time weight prep (matmul layout + bf16 for single-pass MXU / halved w3 DMA).
    w1 = w62.reshape(CMID, C).T.astype(jnp.bfloat16)   # [C, CMID]
    b1 = b62.reshape(1, CMID)                          # f32
    w2 = w63.reshape(C, CMID).T.astype(jnp.bfloat16)   # [CMID, C]
    b2 = b63.reshape(1, C)                             # f32
    w3 = w64.reshape(C, C).astype(jnp.bfloat16)        # [C_out, C_in] (native)

    out = se_block(x193, x194, w1, b1, w2, b2, w3)
    jax.block_until_ready(out)

    # Plain-JAX f32 reference mirroring the PyTorch forward.
    s = x194.reshape(1, C)
    h_ref = jnp.maximum(s @ w62.reshape(CMID, C).T + b62[None, :], 0.0)
    gate_ref = jax.nn.sigmoid(h_ref @ w63.reshape(C, CMID).T + b63[None, :])  # [1, C]
    y_ref = x193 * gate_ref.reshape(1, C, 1, 1)
    ref = jnp.einsum('oi,nihw->nohw', w64.reshape(C, C), y_ref)

    assert out.shape == (N, C, H, W)
    assert jnp.allclose(out, ref, atol=5e-2, rtol=5e-2), float(jnp.max(jnp.abs(out - ref)))

    print("KERNEL_OK")
</pallas_src>

<mosaic_0001>
module attributes {stable_mosaic.version = 11 : i64} {
  func.func @se_block_kernel(%arg0: memref<1x440xf32, #tpu.memory_space<vmem>>, %arg1: memref<440x49xf32, #tpu.memory_space<vmem>>, %arg2: memref<440x110xbf16, #tpu.memory_space<vmem>>, %arg3: memref<1x110xf32, #tpu.memory_space<vmem>>, %arg4: memref<110x440xbf16, #tpu.memory_space<vmem>>, %arg5: memref<1x440xf32, #tpu.memory_space<vmem>>, %arg6: memref<440x440xbf16, #tpu.memory_space<any>>, %arg7: memref<440x49xf32, #tpu.memory_space<vmem>>, %arg8: memref<440x440xbf16, #tpu.memory_space<vmem>>, %arg9: memref<!tpu.dma_semaphore, #tpu.memory_space<semaphore_mem>>) attributes {dimension_semantics = [], scalar_prefetch = 0 : i64, scratch_operands = 2 : i64, tpu.core_type = #tpu.core_type<tc>} {
    tpu.enqueue_dma source(%arg6 : memref<440x440xbf16, #tpu.memory_space<any>>) target(%arg8 : memref<440x440xbf16, #tpu.memory_space<vmem>>) target_semaphore(%arg9 : memref<!tpu.dma_semaphore, #tpu.memory_space<semaphore_mem>>)
    %c0 = arith.constant 0 : index
    %c0_0 = arith.constant 0 : index
    %0 = vector.load %arg0[%c0, %c0_0] : memref<1x440xf32, #tpu.memory_space<vmem>>, vector<1x440xf32>
    %1 = arith.truncf %0 : vector<1x440xf32> to vector<1x440xbf16>
    %c0_1 = arith.constant 0 : index
    %c0_2 = arith.constant 0 : index
    %2 = vector.load %arg2[%c0_1, %c0_2] : memref<440x110xbf16, #tpu.memory_space<vmem>>, vector<440x110xbf16>
    %cst = arith.constant dense<0.000000e+00> : vector<1x110xf32>
    %3 = tpu.matmul %1, %2, %cst {dimension_numbers = #tpu.dot_dimension_numbers<[1], [0], [0], [1], [0, 0, 1, 1], [], []>} : vector<1x440xbf16>, vector<440x110xbf16>, vector<1x110xf32> -> vector<1x110xf32>
    %c0_3 = arith.constant 0 : index
    %c0_4 = arith.constant 0 : index
    %4 = vector.load %arg3[%c0_3, %c0_4] : memref<1x110xf32, #tpu.memory_space<vmem>>, vector<1x110xf32>
    %5 = arith.addf %3, %4 : vector<1x110xf32>
    %cst_5 = arith.constant 0.000000e+00 : f32
    %6 = vector.broadcast %cst_5 : f32 to vector<1x110xf32>
    %7 = arith.maximumf %5, %6 : vector<1x110xf32>
    %8 = arith.truncf %7 : vector<1x110xf32> to vector<1x110xbf16>
    %c0_6 = arith.constant 0 : index
    %c0_7 = arith.constant 0 : index
    %9 = vector.load %arg4[%c0_6, %c0_7] : memref<110x440xbf16, #tpu.memory_space<vmem>>, vector<110x440xbf16>
    %cst_8 = arith.constant dense<0.000000e+00> : vector<1x440xf32>
    %10 = tpu.matmul %8, %9, %cst_8 {dimension_numbers = #tpu.dot_dimension_numbers<[1], [0], [0], [1], [0, 0, 1, 1], [], []>} : vector<1x110xbf16>, vector<110x440xbf16>, vector<1x440xf32> -> vector<1x440xf32>
    %c0_9 = arith.constant 0 : index
    %c0_10 = arith.constant 0 : index
    %11 = vector.load %arg5[%c0_9, %c0_10] : memref<1x440xf32, #tpu.memory_space<vmem>>, vector<1x440xf32>
    %12 = arith.addf %10, %11 : vector<1x440xf32>
    %13 = arith.negf %12 : vector<1x440xf32>
    %14 = math.exp %13 : vector<1x440xf32>
    %cst_11 = arith.constant 1.000000e+00 : f32
    %15 = vector.broadcast %cst_11 : f32 to vector<1x440xf32>
    %16 = arith.addf %15, %14 : vector<1x440xf32>
    %17 = arith.divf %15, %16 : vector<1x440xf32>
    tpu.wait_dma2 semaphore(%arg9 : memref<!tpu.dma_semaphore, #tpu.memory_space<semaphore_mem>>) src(%arg6 : memref<440x440xbf16, #tpu.memory_space<any>>) dst(%arg8 : memref<440x440xbf16, #tpu.memory_space<vmem>>)
    %c0_12 = arith.constant 0 : index
    %c0_13 = arith.constant 0 : index
    %18 = vector.load %arg8[%c0_12, %c0_13] : memref<440x440xbf16, #tpu.memory_space<vmem>>, vector<440x440xbf16>
    %19 = arith.truncf %17 : vector<1x440xf32> to vector<1x440xbf16>
    %20 = vector.broadcast %19 : vector<1x440xbf16> to vector<440x440xbf16>
    %21 = arith.mulf %18, %20 : vector<440x440xbf16>
    %c0_14 = arith.constant 0 : index
    %c0_15 = arith.constant 0 : index
    %22 = vector.load %arg1[%c0_14, %c0_15] : memref<440x49xf32, #tpu.memory_space<vmem>>, vector<440x49xf32>
    %23 = arith.truncf %22 : vector<440x49xf32> to vector<440x49xbf16>
    %cst_16 = arith.constant dense<0.000000e+00> : vector<440x49xf32>
    %24 = tpu.matmul %21, %23, %cst_16 {dimension_numbers = #tpu.dot_dimension_numbers<[1], [0], [0], [1], [0, 0, 1, 1], [], []>} : vector<440x440xbf16>, vector<440x49xbf16>, vector<440x49xf32> -> vector<440x49xf32>
    %c0_17 = arith.constant 0 : index
    %c0_18 = arith.constant 0 : index
    %25 = vector.load %arg7[%c0_17, %c0_18] : memref<440x49xf32, #tpu.memory_space<vmem>>, vector<440x49xf32>
    tpu.vector_store %arg7[%c0_17, %c0_18], %24 {strides = array<i32>} : memref<440x49xf32, #tpu.memory_space<vmem>>, vector<440x49xf32>,
    return
  }
}

</mosaic_0001>

<llo_original>
// kernel: tpu_custom_call.1
$region0: #{tpu_custom_call.1}
  #allocation0 [shape = 'u32[]', space=smem, size = 0x4, offset = 0x4, fixed_abs, tag = 'smem constant byte address 0x4 - core index']
  #allocation1 [shape = 'u32[144,128]{1,0:T(1,128)}', space=vmem, size = 0x12000, scoped, tag = 'internal scratch']
  #allocation2 [shape = 'bf16[440,440]{1,0:T(8,128)(2,1)}', space=vmem, size = 0x6e000, scoped, tag = 'scratch operand']
  #allocation3 [shape = 's32[1]{0}', space=sflag, size = 0x4, scoped, tag = 'scratch operand']
  #allocation4 [shape = 's32[]', space=sflag, size = 0x4, offset = 0, fixed_abs, tag = 'sflag constant byte address 0x0 - dummy sync flag']
  %s0 = inlined_call_operand.vmem [shape: f32[1,440], index: 0, kind: input, shape index: {}]
  %s1 = inlined_call_operand.vmem [shape: f32[440,49], index: 1, kind: input, shape index: {}]
  %s2 = inlined_call_operand.vmem [shape: bf16[440,110], index: 2, kind: input, shape index: {}]
  %s3 = inlined_call_operand.vmem [shape: f32[1,110], index: 3, kind: input, shape index: {}]
  %s4 = inlined_call_operand.vmem [shape: bf16[110,440], index: 4, kind: input, shape index: {}]
  %s5 = inlined_call_operand.vmem [shape: f32[1,440], index: 5, kind: input, shape index: {}]
  %s6 = inlined_call_operand.vmem [shape: bf16[440,440], index: 6, kind: input, shape index: {}]
  %s7 = inlined_call_operand.vmem [shape: f32[440,49], index: 7, kind: output, shape index: {}]
  %s8 = sld [smem:[#allocation0]]
  $region68: #{tpu_custom_call.1} parent=0
    _
  %s10 = ssub.s32 1, %s8
  %s11 = scalar_select 0, %s10, %s8
  // Predicated region
  $region2: #{tpu_custom_call.1} parent=0 // pred_check
    _
  $region3: #{tpu_custom_call.1} parent=0 // pred_check_branch
    %13 = sbr.rel (0) target = $region5
  $region4: #{tpu_custom_call.1} parent=0 // pred_region
    _
  $region5: #{tpu_custom_call.1} parent=0 // pred_fallthru
    _
  // Predicated region
  $region6: #{tpu_custom_call.1} parent=0 // pred_check
    _
  $region7: #{tpu_custom_call.1} parent=0 // pred_check_branch
    %15 = sbr.rel (0) target = $region9
  $region8: #{tpu_custom_call.1} parent=0 // pred_region
    _
  $region9: #{tpu_custom_call.1} parent=0 // pred_fallthru
    _
  // Predicated region
  $region10: #{tpu_custom_call.1} parent=0 // pred_check
    _
  $region11: #{tpu_custom_call.1} parent=0 // pred_check_branch
    %17 = sbr.rel (0) target = $region13
  $region12: #{tpu_custom_call.1} parent=0 // pred_region
    _
  $region13: #{tpu_custom_call.1} parent=0 // pred_fallthru
    _
  // Predicated region
  $region14: #{tpu_custom_call.1} parent=0 // pred_check
    _
  $region15: #{tpu_custom_call.1} parent=0 // pred_check_branch
    %19 = sbr.rel (0) target = $region17
  $region16: #{tpu_custom_call.1} parent=0 // pred_region
    _
  $region17: #{tpu_custom_call.1} parent=0 // pred_fallthru
    _
  // Predicated region
  $region18: #{tpu_custom_call.1} parent=0 // pred_check
    _
  $region19: #{tpu_custom_call.1} parent=0 // pred_check_branch
    %21 = sbr.rel (0) target = $region21
  $region20: #{tpu_custom_call.1} parent=0 // pred_region
    _
  $region21: #{tpu_custom_call.1} parent=0 // pred_fallthru
    _
  // Predicated region
  $region22: #{tpu_custom_call.1} parent=0 // pred_check
    _
  $region23: #{tpu_custom_call.1} parent=0 // pred_check_branch
    %23 = sbr.rel (0) target = $region25
  $region24: #{tpu_custom_call.1} parent=0 // pred_region
    _
  $region25: #{tpu_custom_call.1} parent=0 // pred_fallthru
    _
  %p26 = scmp.lt.u32.totalorder 880, 8
  %p27 = pneg %p26
  // Predicated region
  $region26: #{tpu_custom_call.1} parent=0 // pred_check
    _
  $region27: #{tpu_custom_call.1} parent=0 // pred_check_branch
    %29 = sbr.rel (%p26) target = $region29
  $region28: #{tpu_custom_call.1} parent=0 // pred_region
    %s45 = sand.u32 880, 7
    %p46 = scmp.eq.s32.totalorder %s45, 0
    // Predicated region
    $region41: #{tpu_custom_call.1} parent=28 // pred_check
      %p47 = pneg %p46
    $region42: #{tpu_custom_call.1} parent=28 // pred_check_branch
      %49 = sbr.rel (%p47) target = $region44
    $region43: #{tpu_custom_call.1} parent=28 // pred_region
      loop: start=0, step=1, limit=1
      $region45: #{tpu_custom_call.1} parent=43 // loop_pre_header
        _
      $region46: #{tpu_custom_call.1} parent=43 // loop_header
        %s51 = sphi 0, %s55
        %p52 = scmp.ge.s32.totalorder %s51, 1
        %s56 = sphi %s6, %s6
        %s57 = sphi [#allocation2], [#allocation2]
      $region47: #{tpu_custom_call.1} parent=43 // loop_header_branch
        %54 = sbr.rel (%p52) target = $region51
      $region48: #{tpu_custom_call.1} parent=43 // loop_body
        %v58 = vld [vmem:[%s56] sm:$0xff]
        %59 = vst [vmem:[%s57] sm:$0xff] %v58
        %v60 = vld [vmem:[%s56 + $0x8] sm:$0xff]
        %61 = vst [vmem:[%s57 + $0x8] sm:$0xff] %v60
        %v62 = vld [vmem:[%s56 + $0x10] sm:$0xff]
        %63 = vst [vmem:[%s57 + $0x10] sm:$0xff] %v62
        %v64 = vld [vmem:[%s56 + $0x18] sm:$0xff]
        %65 = vst [vmem:[%s57 + $0x18] sm:$0xff] %v64
        %v66 = vld [vmem:[%s56 + $0x20] sm:$0xff]
        %67 = vst [vmem:[%s57 + $0x20] sm:$0xff] %v66
        %v68 = vld [vmem:[%s56 + $0x28] sm:$0xff]
        %69 = vst [vmem:[%s57 + $0x28] sm:$0xff] %v68
        %v70 = vld [vmem:[%s56 + $0x30] sm:$0xff]
        %71 = vst [vmem:[%s57 + $0x30] sm:$0xff] %v70
        %v72 = vld [vmem:[%s56 + $0x38] sm:$0xff]
        %73 = vst [vmem:[%s57 + $0x38] sm:$0xff] %v72
        %v74 = vld [vmem:[%s56 + $0x40] sm:$0xff]
        %75 = vst [vmem:[%s57 + $0x40] sm:$0xff] %v74
        %v76 = vld [vmem:[%s56 + $0x48] sm:$0xff]
        %77 = vst [vmem:[%s57 + $0x48] sm:$0xff] %v76
        %v78 = vld [vmem:[%s56 + $0x50] sm:$0xff]
        %79 = vst [vmem:[%s57 + $0x50] sm:$0xff] %v78
        %v80 = vld [vmem:[%s56 + $0x58] sm:$0xff]
        %81 = vst [vmem:[%s57 + $0x58] sm:$0xff] %v80
        %v82 = vld [vmem:[%s56 + $0x60] sm:$0xff]
        %83 = vst [vmem:[%s57 + $0x60] sm:$0xff] %v82
        %v84 = vld [vmem:[%s56 + $0x68] sm:$0xff]
        %85 = vst [vmem:[%s57 + $0x68] sm:$0xff] %v84
        %v86 = vld [vmem:[%s56 + $0x70] sm:$0xff]
        %87 = vst [vmem:[%s57 + $0x70] sm:$0xff] %v86
        %v88 = vld [vmem:[%s56 + $0x78] sm:$0xff]
        %89 = vst [vmem:[%s57 + $0x78] sm:$0xff] %v88
        %v90 = vld [vmem:[%s56 + $0x80] sm:$0xff]
        %91 = vst [vmem:[%s57 + $0x80] sm:$0xff] %v90
        %v92 = vld [vmem:[%s56 + $0x88] sm:$0xff]
        %93 = vst [vmem:[%s57 + $0x88] sm:$0xff] %v92
        %v94 = vld [vmem:[%s56 + $0x90] sm:$0xff]
        %95 = vst [vmem:[%s57 + $0x90] sm:$0xff] %v94
        %v96 = vld [vmem:[%s56 + $0x98] sm:$0xff]
        %97 = vst [vmem:[%s57 + $0x98] sm:$0xff] %v96
        %v98 = vld [vmem:[%s56 + $0xa0] sm:$0xff]
        %99 = vst [vmem:[%s57 + $0xa0] sm:$0xff] %v98
        %v100 = vld [vmem:[%s56 + $0xa8] sm:$0xff]
        %101 = vst [vmem:[%s57 + $0xa8] sm:$0xff] %v100
        %v102 = vld [vmem:[%s56 + $0xb0] sm:$0xff]
        %103 = vst [vmem:[%s57 + $0xb0] sm:$0xff] %v102
        %v104 = vld [vmem:[%s56 + $0xb8] sm:$0xff]
        %105 = vst [vmem:[%s57 + $0xb8] sm:$0xff] %v104
        %v106 = vld [vmem:[%s56 + $0xc0] sm:$0xff]
        %107 = vst [vmem:[%s57 + $0xc0] sm:$0xff] %v106
        %v108 = vld [vmem:[%s56 + $0xc8] sm:$0xff]
        %109 = vst [vmem:[%s57 + $0xc8] sm:$0xff] %v108
        %v110 = vld [vmem:[%s56 + $0xd0] sm:$0xff]
        %111 = vst [vmem:[%s57 + $0xd0] sm:$0xff] %v110
        %v112 = vld [vmem:[%s56 + $0xd8] sm:$0xff]
        %113 = vst [vmem:[%s57 + $0xd8] sm:$0xff] %v112
        %v114 = vld [vmem:[%s56 + $0xe0] sm:$0xff]
        %115 = vst [vmem:[%s57 + $0xe0] sm:$0xff] %v114
        %v116 = vld [vmem:[%s56 + $0xe8] sm:$0xff]
        %117 = vst [vmem:[%s57 + $0xe8] sm:$0xff] %v116
        %v118 = vld [vmem:[%s56 + $0xf0] sm:$0xff]
        %119 = vst [vmem:[%s57 + $0xf0] sm:$0xff] %v118
        %v120 = vld [vmem:[%s56 + $0xf8] sm:$0xff]
        %121 = vst [vmem:[%s57 + $0xf8] sm:$0xff] %v120
        %v122 = vld [vmem:[%s56 + $0x100] sm:$0xff]
        %123 = vst [vmem:[%s57 + $0x100] sm:$0xff] %v122
        %v124 = vld [vmem:[%s56 + $0x108] sm:$0xff]
        %125 = vst [vmem:[%s57 + $0x108] sm:$0xff] %v124
        %v126 = vld [vmem:[%s56 + $0x110] sm:$0xff]
        %127 = vst [vmem:[%s57 + $0x110] sm:$0xff] %v126
        %v128 = vld [vmem:[%s56 + $0x118] sm:$0xff]
        %129 = vst [vmem:[%s57 + $0x118] sm:$0xff] %v128
        %v130 = vld [vmem:[%s56 + $0x120] sm:$0xff]
        %131 = vst [vmem:[%s57 + $0x120] sm:$0xff] %v130
        %v132 = vld [vmem:[%s56 + $0x128] sm:$0xff]
        %133 = vst [vmem:[%s57 + $0x128] sm:$0xff] %v132
        %v134 = vld [vmem:[%s56 + $0x130] sm:$0xff]
        %135 = vst [vmem:[%s57 + $0x130] sm:$0xff] %v134
        %v136 = vld [vmem:[%s56 + $0x138] sm:$0xff]
        %137 = vst [vmem:[%s57 + $0x138] sm:$0xff] %v136
        %v138 = vld [vmem:[%s56 + $0x140] sm:$0xff]
        %139 = vst [vmem:[%s57 + $0x140] sm:$0xff] %v138
        %v140 = vld [vmem:[%s56 + $0x148] sm:$0xff]
        %141 = vst [vmem:[%s57 + $0x148] sm:$0xff] %v140
        %v142 = vld [vmem:[%s56 + $0x150] sm:$0xff]
        %143 = vst [vmem:[%s57 + $0x150] sm:$0xff] %v142
        %v144 = vld [vmem:[%s56 + $0x158] sm:$0xff]
        %145 = vst [vmem:[%s57 + $0x158] sm:$0xff] %v144
        %v146 = vld [vmem:[%s56 + $0x160] sm:$0xff]
        %147 = vst [vmem:[%s57 + $0x160] sm:$0xff] %v146
        %v148 = vld [vmem:[%s56 + $0x168] sm:$0xff]
        %149 = vst [vmem:[%s57 + $0x168] sm:$0xff] %v148
        %v150 = vld [vmem:[%s56 + $0x170] sm:$0xff]
        %151 = vst [vmem:[%s57 + $0x170] sm:$0xff] %v150
        %v152 = vld [vmem:[%s56 + $0x178] sm:$0xff]
        %153 = vst [vmem:[%s57 + $0x178] sm:$0xff] %v152
        %v154 = vld [vmem:[%s56 + $0x180] sm:$0xff]
        %155 = vst [vmem:[%s57 + $0x180] sm:$0xff] %v154
        %v156 = vld [vmem:[%s56 + $0x188] sm:$0xff]
        %157 = vst [vmem:[%s57 + $0x188] sm:$0xff] %v156
        %v158 = vld [vmem:[%s56 + $0x190] sm:$0xff]
        %159 = vst [vmem:[%s57 + $0x190] sm:$0xff] %v158
        %v160 = vld [vmem:[%s56 + $0x198] sm:$0xff]
        %161 = vst [vmem:[%s57 + $0x198] sm:$0xff] %v160
        %v162 = vld [vmem:[%s56 + $0x1a0] sm:$0xff]
        %163 = vst [vmem:[%s57 + $0x1a0] sm:$0xff] %v162
        %v164 = vld [vmem:[%s56 + $0x1a8] sm:$0xff]
        %165 = vst [vmem:[%s57 + $0x1a8] sm:$0xff] %v164
        %v166 = vld [vmem:[%s56 + $0x1b0] sm:$0xff]
        %167 = vst [vmem:[%s57 + $0x1b0] sm:$0xff] %v166
        %v168 = vld [vmem:[%s56 + $0x1b8] sm:$0xff]
        %169 = vst [vmem:[%s57 + $0x1b8] sm:$0xff] %v168
        %v170 = vld [vmem:[%s56 + $0x1c0] sm:$0xff]
        %171 = vst [vmem:[%s57 + $0x1c0] sm:$0xff] %v170
        %v172 = vld [vmem:[%s56 + $0x1c8] sm:$0xff]
        %173 = vst [vmem:[%s57 + $0x1c8] sm:$0xff] %v172
        %v174 = vld [vmem:[%s56 + $0x1d0] sm:$0xff]
        %175 = vst [vmem:[%s57 + $0x1d0] sm:$0xff] %v174
        %v176 = vld [vmem:[%s56 + $0x1d8] sm:$0xff]
        %177 = vst [vmem:[%s57 + $0x1d8] sm:$0xff] %v176
        %v178 = vld [vmem:[%s56 + $0x1e0] sm:$0xff]
        %179 = vst [vmem:[%s57 + $0x1e0] sm:$0xff] %v178
        %v180 = vld [vmem:[%s56 + $0x1e8] sm:$0xff]
        %181 = vst [vmem:[%s57 + $0x1e8] sm:$0xff] %v180
        %v182 = vld [vmem:[%s56 + $0x1f0] sm:$0xff]
        %183 = vst [vmem:[%s57 + $0x1f0] sm:$0xff] %v182
        %v184 = vld [vmem:[%s56 + $0x1f8] sm:$0xff]
        %185 = vst [vmem:[%s57 + $0x1f8] sm:$0xff] %v184
        %v186 = vld [vmem:[%s56 + $0x200] sm:$0xff]
        %187 = vst [vmem:[%s57 + $0x200] sm:$0xff] %v186
        %v188 = vld [vmem:[%s56 + $0x208] sm:$0xff]
        %189 = vst [vmem:[%s57 + $0x208] sm:$0xff] %v188
        %v190 = vld [vmem:[%s56 + $0x210] sm:$0xff]
        %191 = vst [vmem:[%s57 + $0x210] sm:$0xff] %v190
        %v192 = vld [vmem:[%s56 + $0x218] sm:$0xff]
        %193 = vst [vmem:[%s57 + $0x218] sm:$0xff] %v192
        %v194 = vld [vmem:[%s56 + $0x220] sm:$0xff]
        %195 = vst [vmem:[%s57 + $0x220] sm:$0xff] %v194
        %v196 = vld [vmem:[%s56 + $0x228] sm:$0xff]
        %197 = vst [vmem:[%s57 + $0x228] sm:$0xff] %v196
        %v198 = vld [vmem:[%s56 + $0x230] sm:$0xff]
        %199 = vst [vmem:[%s57 + $0x230] sm:$0xff] %v198
        %v200 = vld [vmem:[%s56 + $0x238] sm:$0xff]
        %201 = vst [vmem:[%s57 + $0x238] sm:$0xff] %v200
        %v202 = vld [vmem:[%s56 + $0x240] sm:$0xff]
        %203 = vst [vmem:[%s57 + $0x240] sm:$0xff] %v202
        %v204 = vld [vmem:[%s56 + $0x248] sm:$0xff]
        %205 = vst [vmem:[%s57 + $0x248] sm:$0xff] %v204
        %v206 = vld [vmem:[%s56 + $0x250] sm:$0xff]
        %207 = vst [vmem:[%s57 + $0x250] sm:$0xff] %v206
        %v208 = vld [vmem:[%s56 + $0x258] sm:$0xff]
        %209 = vst [vmem:[%s57 + $0x258] sm:$0xff] %v208
        %v210 = vld [vmem:[%s56 + $0x260] sm:$0xff]
        %211 = vst [vmem:[%s57 + $0x260] sm:$0xff] %v210
        %v212 = vld [vmem:[%s56 + $0x268] sm:$0xff]
        %213 = vst [vmem:[%s57 + $0x268] sm:$0xff] %v212
        %v214 = vld [vmem:[%s56 + $0x270] sm:$0xff]
        %215 = vst [vmem:[%s57 + $0x270] sm:$0xff] %v214
        %v216 = vld [vmem:[%s56 + $0x278] sm:$0xff]
        %217 = vst [vmem:[%s57 + $0x278] sm:$0xff] %v216
        %v218 = vld [vmem:[%s56 + $0x280] sm:$0xff]
        %219 = vst [vmem:[%s57 + $0x280] sm:$0xff] %v218
        %v220 = vld [vmem:[%s56 + $0x288] sm:$0xff]
        %221 = vst [vmem:[%s57 + $0x288] sm:$0xff] %v220
        %v222 = vld [vmem:[%s56 + $0x290] sm:$0xff]
        %223 = vst [vmem:[%s57 + $0x290] sm:$0xff] %v222
        %v224 = vld [vmem:[%s56 + $0x298] sm:$0xff]
        %225 = vst [vmem:[%s57 + $0x298] sm:$0xff] %v224
        %v226 = vld [vmem:[%s56 + $0x2a0] sm:$0xff]
        %227 = vst [vmem:[%s57 + $0x2a0] sm:$0xff] %v226
        %v228 = vld [vmem:[%s56 + $0x2a8] sm:$0xff]
        %229 = vst [vmem:[%s57 + $0x2a8] sm:$0xff] %v228
        %v230 = vld [vmem:[%s56 + $0x2b0] sm:$0xff]
        %231 = vst [vmem:[%s57 + $0x2b0] sm:$0xff] %v230
        %v232 = vld [vmem:[%s56 + $0x2b8] sm:$0xff]
        %233 = vst [vmem:[%s57 + $0x2b8] sm:$0xff] %v232
        %v234 = vld [vmem:[%s56 + $0x2c0] sm:$0xff]
        %235 = vst [vmem:[%s57 + $0x2c0] sm:$0xff] %v234
        %v236 = vld [vmem:[%s56 + $0x2c8] sm:$0xff]
        %237 = vst [vmem:[%s57 + $0x2c8] sm:$0xff] %v236
        %v238 = vld [vmem:[%s56 + $0x2d0] sm:$0xff]
        %239 = vst [vmem:[%s57 + $0x2d0] sm:$0xff] %v238
        %v240 = vld [vmem:[%s56 + $0x2d8] sm:$0xff]
        %241 = vst [vmem:[%s57 + $0x2d8] sm:$0xff] %v240
        %v242 = vld [vmem:[%s56 + $0x2e0] sm:$0xff]
        %243 = vst [vmem:[%s57 + $0x2e0] sm:$0xff] %v242
        %v244 = vld [vmem:[%s56 + $0x2e8] sm:$0xff]
        %245 = vst [vmem:[%s57 + $0x2e8] sm:$0xff] %v244
        %v246 = vld [vmem:[%s56 + $0x2f0] sm:$0xff]
        %247 = vst [vmem:[%s57 + $0x2f0] sm:$0xff] %v246
        %v248 = vld [vmem:[%s56 + $0x2f8] sm:$0xff]
        %249 = vst [vmem:[%s57 + $0x2f8] sm:$0xff] %v248
        %v250 = vld [vmem:[%s56 + $0x300] sm:$0xff]
        %251 = vst [vmem:[%s57 + $0x300] sm:$0xff] %v250
        %v252 = vld [vmem:[%s56 + $0x308] sm:$0xff]
        %253 = vst [vmem:[%s57 + $0x308] sm:$0xff] %v252
        %v254 = vld [vmem:[%s56 + $0x310] sm:$0xff]
        %255 = vst [vmem:[%s57 + $0x310] sm:$0xff] %v254
        %v256 = vld [vmem:[%s56 + $0x318] sm:$0xff]
        %257 = vst [vmem:[%s57 + $0x318] sm:$0xff] %v256
        %v258 = vld [vmem:[%s56 + $0x320] sm:$0xff]
        %259 = vst [vmem:[%s57 + $0x320] sm:$0xff] %v258
        %v260 = vld [vmem:[%s56 + $0x328] sm:$0xff]
        %261 = vst [vmem:[%s57 + $0x328] sm:$0xff] %v260
        %v262 = vld [vmem:[%s56 + $0x330] sm:$0xff]
        %263 = vst [vmem:[%s57 + $0x330] sm:$0xff] %v262
        %v264 = vld [vmem:[%s56 + $0x338] sm:$0xff]
        %265 = vst [vmem:[%s57 + $0x338] sm:$0xff] %v264
        %v266 = vld [vmem:[%s56 + $0x340] sm:$0xff]
        %267 = vst [vmem:[%s57 + $0x340] sm:$0xff] %v266
        %v268 = vld [vmem:[%s56 + $0x348] sm:$0xff]
        %269 = vst [vmem:[%s57 + $0x348] sm:$0xff] %v268
        %v270 = vld [vmem:[%s56 + $0x350] sm:$0xff]
        %271 = vst [vmem:[%s57 + $0x350] sm:$0xff] %v270
        %v272 = vld [vmem:[%s56 + $0x358] sm:$0xff]
        %273 = vst [vmem:[%s57 + $0x358] sm:$0xff] %v272
        %v274 = vld [vmem:[%s56 + $0x360] sm:$0xff]
        %275 = vst [vmem:[%s57 + $0x360] sm:$0xff] %v274
        %v276 = vld [vmem:[%s56 + $0x368] sm:$0xff]
        %277 = vst [vmem:[%s57 + $0x368] sm:$0xff] %v276
      $region49: #{tpu_custom_call.1} parent=43 // loop_footer
        %s55 = sadd.s32 1, %s51
      $region50: #{tpu_custom_call.1} parent=43 // loop_footer_branch
        %50 = sbr.rel target = $region46
      $region51: #{tpu_custom_call.1} parent=43 // loop_exit
        _
    $region44: #{tpu_custom_call.1} parent=28 // pred_fallthru
      _
    %p278 = pneg %p46
    // Predicated region
    $region52: #{tpu_custom_call.1} parent=28 // pred_check
      _
    $region53: #{tpu_custom_call.1} parent=28 // pred_check_branch
      %280 = sbr.rel (%p46) target = $region55
    $region54: #{tpu_custom_call.1} parent=28 // pred_region
      %s281 = sand.u32 880, 7
    $region55: #{tpu_custom_call.1} parent=28 // pred_fallthru
      _
  $region29: #{tpu_custom_call.1} parent=0 // pred_fallthru
    _
  // Predicated region
  $region30: #{tpu_custom_call.1} parent=0 // pred_check
    %p30 = pneg %p26
  $region31: #{tpu_custom_call.1} parent=0 // pred_check_branch
    %32 = sbr.rel (%p30) target = $region33
  $region32: #{tpu_custom_call.1} parent=0 // pred_region
    %s33 = sshll.u32 1, 880
    %s34 = ssub.s32 %s33, 1
    loop: start=0, step=1, limit=1
    $region34: #{tpu_custom_call.1} parent=32 // loop_pre_header
      _
    $region35: #{tpu_custom_call.1} parent=32 // loop_header
      %s36 = sphi 0, %s40
      %p37 = scmp.ge.s32.totalorder %s36, 1
      %s41 = sphi %s6, %s6
      %s42 = sphi [#allocation2], [#allocation2]
    $region36: #{tpu_custom_call.1} parent=32 // loop_header_branch
      %39 = sbr.rel (%p37) target = $region40
    $region37: #{tpu_custom_call.1} parent=32 // loop_body
      %v43 = vld [vmem:[%s41] sm:%s34]
      %44 = vst [vmem:[%s42] sm:%s34] %v43
    $region38: #{tpu_custom_call.1} parent=32 // loop_footer
      %s40 = sadd.s32 1, %s36
    $region39: #{tpu_custom_call.1} parent=32 // loop_footer_branch
      %35 = sbr.rel target = $region35
    $region40: #{tpu_custom_call.1} parent=32 // loop_exit
      _
  $region33: #{tpu_custom_call.1} parent=0 // pred_fallthru
    _
  // Predicated region
  $region56: #{tpu_custom_call.1} parent=0 // pred_check
    _
  $region57: #{tpu_custom_call.1} parent=0 // pred_check_branch
    %284 = sbr.rel (0) target = $region59
  $region58: #{tpu_custom_call.1} parent=0 // pred_region
    %285 = vsyncadd [#allocation3], 14080
  $region59: #{tpu_custom_call.1} parent=0 // pred_fallthru
    _
  %v286 = vld [vmem:[%s0] sm:$0xf]
  %v288 = vlaneseq
  %v289 = vshrl.u32 %v288, 7
  %v290 = vsub.s32 0, %v289
  %v291 = vrot.slane %v286, %v290
  %v292 = vlaneseq
  %v293 = vshrl.u32 %v292, 7
  %v294 = vsub.s32 1, %v293
  %v295 = vrot.slane %v286, %v294
  %v296 = vlaneseq
  %v297 = vshrl.u32 %v296, 7
  %v298 = vsub.s32 2, %v297
  %v299 = vrot.slane %v286, %v298
  %v300 = vlaneseq
  %v301 = vshrl.u32 %v300, 7
  %v302 = vsub.s32 3, %v301
  %v303 = vrot.slane %v286, %v302
  %v308 = vpack.c.bf16 %v291, %v291
  %v309 = vpack.c.bf16 %v295, %v295
  %v310 = vpack.c.bf16 %v299, %v299
  %v311 = vpack.c.bf16 %v303, %v303
  %v312 = vld [vmem:[%s2] sm:$0xf]
  %v313 = vld [vmem:[%s2 + $0x4] sm:$0xf]
  %v314 = vld [vmem:[%s2 + $0x8] sm:$0xf]
  %v315 = vld [vmem:[%s2 + $0xc] sm:$0xf]
  %v316 = vld [vmem:[%s2 + $0x10] sm:$0xf]
  %v317 = vld [vmem:[%s2 + $0x14] sm:$0xf]
  %v318 = vld [vmem:[%s2 + $0x18] sm:$0xf]
  %v319 = vld [vmem:[%s2 + $0x1c] sm:$0xf]
  %v320 = vld [vmem:[%s2 + $0x20] sm:$0xf]
  %v321 = vld [vmem:[%s2 + $0x24] sm:$0xf]
  %v322 = vld [vmem:[%s2 + $0x28] sm:$0xf]
  %v323 = vld [vmem:[%s2 + $0x2c] sm:$0xf]
  %v324 = vld [vmem:[%s2 + $0x30] sm:$0xf]
  %v325 = vld [vmem:[%s2 + $0x34] sm:$0xf]
  %v326 = vld [vmem:[%s2 + $0x38] sm:$0xf]
  %v327 = vld [vmem:[%s2 + $0x3c] sm:$0xf]
  %v328 = vld [vmem:[%s2 + $0x40] sm:$0xf]
  %v329 = vld [vmem:[%s2 + $0x44] sm:$0xf]
  %v330 = vld [vmem:[%s2 + $0x48] sm:$0xf]
  %v331 = vld [vmem:[%s2 + $0x4c] sm:$0xf]
  %v332 = vld [vmem:[%s2 + $0x50] sm:$0xf]
  %v333 = vld [vmem:[%s2 + $0x54] sm:$0xf]
  %v334 = vld [vmem:[%s2 + $0x58] sm:$0xf]
  %v335 = vld [vmem:[%s2 + $0x5c] sm:$0xf]
  %v336 = vld [vmem:[%s2 + $0x60] sm:$0xf]
  %v337 = vld [vmem:[%s2 + $0x64] sm:$0xf]
  %v338 = vld [vmem:[%s2 + $0x68] sm:$0xf]
  %v339 = vld [vmem:[%s2 + $0x6c] sm:$0xf]
  %v340 = vld [vmem:[%s2 + $0x70] sm:$0xf]
  %v341 = vld [vmem:[%s2 + $0x74] sm:$0xf]
  %v342 = vld [vmem:[%s2 + $0x78] sm:$0xf]
  %v343 = vld [vmem:[%s2 + $0x7c] sm:$0xf]
  %v344 = vld [vmem:[%s2 + $0x80] sm:$0xf]
  %v345 = vld [vmem:[%s2 + $0x84] sm:$0xf]
  %v346 = vld [vmem:[%s2 + $0x88] sm:$0xf]
  %v347 = vld [vmem:[%s2 + $0x8c] sm:$0xf]
  %v348 = vld [vmem:[%s2 + $0x90] sm:$0xf]
  %v349 = vld [vmem:[%s2 + $0x94] sm:$0xf]
  %v350 = vld [vmem:[%s2 + $0x98] sm:$0xf]
  %v351 = vld [vmem:[%s2 + $0x9c] sm:$0xf]
  %v352 = vld [vmem:[%s2 + $0xa0] sm:$0xf]
  %v353 = vld [vmem:[%s2 + $0xa4] sm:$0xf]
  %v354 = vld [vmem:[%s2 + $0xa8] sm:$0xf]
  %v355 = vld [vmem:[%s2 + $0xac] sm:$0xf]
  %v356 = vld [vmem:[%s2 + $0xb0] sm:$0xf]
  %v357 = vld [vmem:[%s2 + $0xb4] sm:$0xf]
  %v358 = vld [vmem:[%s2 + $0xb8] sm:$0xf]
  %v359 = vld [vmem:[%s2 + $0xbc] sm:$0xf]
  %v360 = vld [vmem:[%s2 + $0xc0] sm:$0xf]
  %v361 = vld [vmem:[%s2 + $0xc4] sm:$0xf]
  %v362 = vld [vmem:[%s2 + $0xc8] sm:$0xf]
  %v363 = vld [vmem:[%s2 + $0xcc] sm:$0xf]
  %v364 = vld [vmem:[%s2 + $0xd0] sm:$0xf]
  %v365 = vld [vmem:[%s2 + $0xd4] sm:$0xf]
  %v366 = vld [vmem:[%s2 + $0xd8] sm:$0xf]
  %v367 = vld [vmem:[%s3] sm:$0x1]
  %v423 = vunpack.c.l.b16 %v312
  %v424 = vunpack.c.l.b16 %v313
  %v425 = vunpack.c.l.b16 %v314
  %v426 = vunpack.c.l.b16 %v315
  %v427 = vunpack.c.l.b16 %v316
  %v428 = vunpack.c.l.b16 %v317
  %v429 = vunpack.c.l.b16 %v318
  %v430 = vunpack.c.l.b16 %v319
  %v431 = vunpack.c.l.b16 %v320
  %v432 = vunpack.c.l.b16 %v321
  %v433 = vunpack.c.l.b16 %v322
  %v434 = vunpack.c.l.b16 %v323
  %v435 = vunpack.c.l.b16 %v324
  %v436 = vunpack.c.l.b16 %v325
  %v437 = vunpack.c.l.b16 %v326
  %v438 = vunpack.c.l.b16 %v327
  %v439 = vunpack.c.l.b16 %v328
  %v440 = vunpack.c.l.b16 %v329
  %v441 = vunpack.c.l.b16 %v330
  %v442 = vunpack.c.l.b16 %v331
  %v443 = vunpack.c.l.b16 %v332
  %v444 = vunpack.c.l.b16 %v333
  %v445 = vunpack.c.l.b16 %v334
  %v446 = vunpack.c.l.b16 %v335
  %v447 = vunpack.c.l.b16 %v336
  %v448 = vunpack.c.l.b16 %v337
  %v449 = vunpack.c.l.b16 %v338
  %v450 = vunpack.c.l.b16 %v339
  %v451 = vunpack.c.l.b16 %v340
  %v452 = vunpack.c.l.b16 %v341
  %v453 = vunpack.c.l.b16 %v342
  %v454 = vunpack.c.l.b16 %v343
  %v455 = vunpack.c.l.b16 %v344
  %v456 = vunpack.c.l.b16 %v345
  %v457 = vunpack.c.l.b16 %v346
  %v458 = vunpack.c.l.b16 %v347
  %v459 = vunpack.c.l.b16 %v348
  %v460 = vunpack.c.l.b16 %v349
  %v461 = vunpack.c.l.b16 %v350
  %v462 = vunpack.c.l.b16 %v351
  %v463 = vunpack.c.l.b16 %v352
  %v464 = vunpack.c.l.b16 %v353
  %v465 = vunpack.c.l.b16 %v354
  %v466 = vunpack.c.l.b16 %v355
  %v467 = vunpack.c.l.b16 %v356
  %v468 = vunpack.c.l.b16 %v357
  %v469 = vunpack.c.l.b16 %v358
  %v470 = vunpack.c.l.b16 %v359
  %v471 = vunpack.c.l.b16 %v360
  %v472 = vunpack.c.l.b16 %v361
  %v473 = vunpack.c.l.b16 %v362
  %v474 = vunpack.c.l.b16 %v363
  %v475 = vunpack.c.l.b16 %v364
  %v476 = vunpack.c.l.b16 %v365
  %v477 = vunpack.c.l.b16 %v366
  %v478 = vpack.c.b16 %v424, %v423
  %v479 = vpack.c.b16 %v426, %v425
  %v480 = vpack.c.b16 %v428, %v427
  %v481 = vpack.c.b16 %v430, %v429
  %v482 = vpack.c.b16 %v432, %v431
  %v483 = vpack.c.b16 %v434, %v433
  %v484 = vpack.c.b16 %v436, %v435
  %v485 = vpack.c.b16 %v438, %v437
  %v486 = vpack.c.b16 %v440, %v439
  %v487 = vpack.c.b16 %v442, %v441
  %v488 = vpack.c.b16 %v444, %v443
  %v489 = vpack.c.b16 %v446, %v445
  %v490 = vpack.c.b16 %v448, %v447
  %v491 = vpack.c.b16 %v450, %v449
  %v492 = vpack.c.b16 %v452, %v451
  %v493 = vpack.c.b16 %v454, %v453
  %v494 = vpack.c.b16 %v456, %v455
  %v495 = vpack.c.b16 %v458, %v457
  %v496 = vpack.c.b16 %v460, %v459
  %v497 = vpack.c.b16 %v462, %v461
  %v498 = vpack.c.b16 %v464, %v463
  %v499 = vpack.c.b16 %v466, %v465
  %v500 = vpack.c.b16 %v468, %v467
  %v501 = vpack.c.b16 %v470, %v469
  %v502 = vpack.c.b16 %v472, %v471
  %v503 = vpack.c.b16 %v474, %v473
  %v504 = vpack.c.b16 %v476, %v475
  %v505 = vpack.c.b16 %v477, %v477
  %vm533 = vcmask 457728
  %v535 = vsel %vm533, %v311, 0
  %vm537 = vcmask 1043456
  %v539 = vsel %vm537, %v505, 0
  %541 = vmatprep.subr.bf16.mxu0 0
  %542 = vmatpush1.bf16.msra.mxu0 %v485
  %543 = vmatprep.subr.bf16.mxu0 0
  %544 = vmatpush1.bf16.msra.mxu0 %v484
  %545 = vmatprep.subr.bf16.mxu0 0
  %546 = vmatpush1.bf16.msra.mxu0 %v483
  %547 = vmatprep.subr.bf16.mxu0 0
  %548 = vmatpush1.bf16.msra.mxu0 %v482
  %549 = vmatprep.subr.bf16.mxu0 0
  %550 = vmatpush1.bf16.msra.mxu0 %v481
  %551 = vmatprep.subr.bf16.mxu0 0
  %552 = vmatpush1.bf16.msra.mxu0 %v480
  %553 = vmatprep.subr.bf16.mxu0 0
  %554 = vmatpush1.bf16.msra.mxu0 %v479
  %555 = vmatprep.subr.bf16.mxu0 0
  %556 = vmatpush1.bf16.msra.mxu0 %v478
  %557 = vmatprep.subr.bf16.mxu0 0
  %558 = vmatpush2.bf16.msra.mxu0 %v493
  %559 = vmatprep.subr.bf16.mxu0 0
  %560 = vmatpush2.bf16.msra.mxu0 %v492
  %561 = vmatprep.subr.bf16.mxu0 0
  %562 = vmatpush2.bf16.msra.mxu0 %v491
  %563 = vmatprep.subr.bf16.mxu0 0
  %564 = vmatpush2.bf16.msra.mxu0 %v490
  %565 = vmatprep.subr.bf16.mxu0 0
  %566 = vmatpush2.bf16.msra.mxu0 %v489
  %567 = vmatprep.subr.bf16.mxu0 0
  %568 = vmatpush2.bf16.msra.mxu0 %v488
  %569 = vmatprep.subr.bf16.mxu0 0
  %570 = vmatpush2.bf16.msra.mxu0 %v487
  %571 = vmatprep.subr.bf16.mxu0 0
  %572 = vmatpush2.bf16.msra.mxu0 %v486
  %573 = vmatprep.mubr.bf16.mxu0 %v309
  %574 = vmatmul.mubr.bf16.gmra.mxu0 %v308
  %v575 = vpop.f32.mrf.mxu0
  %v576 = vadd.f32 %v367, %v575
  %v577 = vpop.f32.mrf.mxu0
  %v578 = vpop.f32.mrf.mxu0
  %v579 = vpop.f32.mrf.mxu0
  %580 = vdwg.mxu0
  %581 = vmatprep.subr.bf16.mxu0 0
  %582 = vmatpush1.bf16.msra.mxu0 %v501
  %583 = vmatprep.subr.bf16.mxu0 0
  %584 = vmatpush1.bf16.msra.mxu0 %v500
  %585 = vmatprep.subr.bf16.mxu0 0
  %586 = vmatpush1.bf16.msra.mxu0 %v499
  %587 = vmatprep.subr.bf16.mxu0 0
  %588 = vmatpush1.bf16.msra.mxu0 %v498
  %589 = vmatprep.subr.bf16.mxu0 0
  %590 = vmatpush1.bf16.msra.mxu0 %v497
  %591 = vmatprep.subr.bf16.mxu0 0
  %592 = vmatpush1.bf16.msra.mxu0 %v496
  %593 = vmatprep.subr.bf16.mxu0 0
  %594 = vmatpush1.bf16.msra.mxu0 %v495
  %595 = vmatprep.subr.bf16.mxu0 0
  %596 = vmatpush1.bf16.msra.mxu0 %v494
  %597 = vmatprep.subr.bf16.mxu0 0
  %598 = vmatpush2.bf16.msra.mxu0 0
  %599 = vmatprep.subr.bf16.mxu0 0
  %600 = vmatpush2.bf16.msra.mxu0 0
  %601 = vmatprep.subr.bf16.mxu0 0
  %602 = vmatpush2.bf16.msra.mxu0 0
  %603 = vmatprep.subr.bf16.mxu0 0
  %604 = vmatpush2.bf16.msra.mxu0 0
  %605 = vmatprep.subr.bf16.mxu0 0
  %606 = vmatpush2.bf16.msra.mxu0 %v539
  %607 = vmatprep.subr.bf16.mxu0 0
  %608 = vmatpush2.bf16.msra.mxu0 %v504
  %609 = vmatprep.subr.bf16.mxu0 0
  %610 = vmatpush2.bf16.msra.mxu0 %v503
  %611 = vmatprep.subr.bf16.mxu0 0
  %612 = vmatpush2.bf16.msra.mxu0 %v502
  %613 = vmatprep.mubr.bf16.mxu0 %v535
  %614 = vmatmul.mubr.bf16.gmra.mxu0 %v310
  %v615 = vpop.f32.mrf.mxu0
  %v616 = vadd.f32 %v576, %v615
  %v617 = vpop.f32.mrf.mxu0
  %v618 = vpop.f32.mrf.mxu0
  %v619 = vpop.f32.mrf.mxu0
  %620 = vdwg.mxu0
  %v621 = vmax.f32 %v616, 0.0
  %v622 = vpack.c.bf16 %v621, %v621
  %v623 = vld [vmem:[%s4] sm:$0xff]
  %v624 = vld [vmem:[%s4 + $0x8] sm:$0xff]
  %v625 = vld [vmem:[%s4 + $0x10] sm:$0xff]
  %v626 = vld [vmem:[%s4 + $0x18] sm:$0xff]
  %v627 = vld [vmem:[%s4 + $0x20] sm:$0xff]
  %v628 = vld [vmem:[%s4 + $0x28] sm:$0xff]
  %v629 = vld [vmem:[%s4 + $0x30] sm:$0xff]
  %v630 = vld [vmem:[%s4 + $0x38] sm:$0xff]
  %v631 = vld [vmem:[%s4 + $0x40] sm:$0xff]
  %v632 = vld [vmem:[%s4 + $0x48] sm:$0xff]
  %v633 = vld [vmem:[%s4 + $0x50] sm:$0xff]
  %v634 = vld [vmem:[%s4 + $0x58] sm:$0xff]
  %v635 = vld [vmem:[%s4 + $0x60] sm:$0xff]
  %v636 = vld [vmem:[%s4 + $0x68] sm:$0xff]
  %v637 = vld [vmem:[%s4 + $0x70] sm:$0xff]
  %v638 = vld [vmem:[%s4 + $0x78] sm:$0xff]
  %v639 = vld [vmem:[%s4 + $0x80] sm:$0xff]
  %v640 = vld [vmem:[%s4 + $0x88] sm:$0xff]
  %v641 = vld [vmem:[%s4 + $0x90] sm:$0xff]
  %v642 = vld [vmem:[%s4 + $0x98] sm:$0xff]
  %v643 = vld [vmem:[%s4 + $0xa0] sm:$0xff]
  %v644 = vld [vmem:[%s4 + $0xa8] sm:$0xff]
  %v645 = vld [vmem:[%s4 + $0xb0] sm:$0xff]
  %v646 = vld [vmem:[%s4 + $0xb8] sm:$0xff]
  %v647 = vld [vmem:[%s4 + $0xc0] sm:$0xff]
  %v648 = vld [vmem:[%s4 + $0xc8] sm:$0xff]
  %v649 = vld [vmem:[%s4 + $0xd0] sm:$0x77]
  %v650 = vld [vmem:[%s4 + $0xd8] sm:$0x77]
  %v651 = vld [vmem:[%s5] sm:$0xf]
  %v680 = vunpack.c.l.b16 %v623
  %v681 = vunpack.c.h.b16 %v623
  %v682 = vunpack.c.l.b16 %v624
  %v683 = vunpack.c.h.b16 %v624
  %v684 = vunpack.c.l.b16 %v625
  %v685 = vunpack.c.h.b16 %v625
  %v686 = vunpack.c.l.b16 %v626
  %v687 = vunpack.c.h.b16 %v626
  %v688 = vunpack.c.l.b16 %v627
  %v689 = vunpack.c.h.b16 %v627
  %v690 = vunpack.c.l.b16 %v628
  %v691 = vunpack.c.h.b16 %v628
  %v692 = vunpack.c.l.b16 %v629
  %v693 = vunpack.c.h.b16 %v629
  %v694 = vunpack.c.l.b16 %v630
  %v695 = vunpack.c.h.b16 %v630
  %v696 = vunpack.c.l.b16 %v631
  %v697 = vunpack.c.h.b16 %v631
  %v698 = vunpack.c.l.b16 %v632
  %v699 = vunpack.c.h.b16 %v632
  %v700 = vunpack.c.l.b16 %v633
  %v701 = vunpack.c.h.b16 %v633
  %v702 = vunpack.c.l.b16 %v634
  %v703 = vunpack.c.h.b16 %v634
  %v704 = vunpack.c.l.b16 %v635
  %v705 = vunpack.c.h.b16 %v635
  %v706 = vunpack.c.l.b16 %v636
  %v707 = vunpack.c.h.b16 %v636
  %v708 = vunpack.c.l.b16 %v637
  %v709 = vunpack.c.h.b16 %v637
  %v710 = vunpack.c.l.b16 %v638
  %v711 = vunpack.c.h.b16 %v638
  %v712 = vunpack.c.l.b16 %v639
  %v713 = vunpack.c.h.b16 %v639
  %v714 = vunpack.c.l.b16 %v640
  %v715 = vunpack.c.h.b16 %v640
  %v716 = vunpack.c.l.b16 %v641
  %v717 = vunpack.c.h.b16 %v641
  %v718 = vunpack.c.l.b16 %v642
  %v719 = vunpack.c.h.b16 %v642
  %v720 = vunpack.c.l.b16 %v643
  %v721 = vunpack.c.h.b16 %v643
  %v722 = vunpack.c.l.b16 %v644
  %v723 = vunpack.c.h.b16 %v644
  %v724 = vunpack.c.l.b16 %v645
  %v725 = vunpack.c.h.b16 %v645
  %v726 = vunpack.c.l.b16 %v646
  %v727 = vunpack.c.h.b16 %v646
  %v728 = vunpack.c.l.b16 %v647
  %v729 = vunpack.c.h.b16 %v647
  %v730 = vunpack.c.l.b16 %v648
  %v731 = vunpack.c.h.b16 %v648
  %v732 = vunpack.c.l.b16 %v649
  %v733 = vunpack.c.h.b16 %v649
  %v734 = vunpack.c.l.b16 %v650
  %v735 = vunpack.c.h.b16 %v650
  %v736 = vpack.c.b16 %v684, %v680
  %v737 = vpack.c.b16 %v685, %v681
  %v738 = vpack.c.b16 %v686, %v682
  %v739 = vpack.c.b16 %v687, %v683
  %v740 = vpack.c.b16 %v692, %v688
  %v741 = vpack.c.b16 %v693, %v689
  %v742 = vpack.c.b16 %v694, %v690
  %v743 = vpack.c.b16 %v695, %v691
  %v744 = vpack.c.b16 %v700, %v696
  %v745 = vpack.c.b16 %v701, %v697
  %v746 = vpack.c.b16 %v702, %v698
  %v747 = vpack.c.b16 %v703, %v699
  %v748 = vpack.c.b16 %v708, %v704
  %v749 = vpack.c.b16 %v709, %v705
  %v750 = vpack.c.b16 %v710, %v706
  %v751 = vpack.c.b16 %v711, %v707
  %v752 = vpack.c.b16 %v716, %v712
  %v753 = vpack.c.b16 %v717, %v713
  %v754 = vpack.c.b16 %v718, %v714
  %v755 = vpack.c.b16 %v719, %v715
  %v756 = vpack.c.b16 %v724, %v720
  %v757 = vpack.c.b16 %v725, %v721
  %v758 = vpack.c.b16 %v726, %v722
  %v759 = vpack.c.b16 %v727, %v723
  %v760 = vpack.c.b16 %v732, %v728
  %v761 = vpack.c.b16 %v733, %v729
  %v762 = vpack.c.b16 %v734, %v730
  %v763 = vpack.c.b16 %v735, %v731
  %v789 = vlaneseq
  %v790 = vshrl.u32 %v789, 7
  %v791 = vsub.s32 0, %v790
  %v792 = vrot.slane %v651, %v791
  %v793 = vlaneseq
  %v794 = vshrl.u32 %v793, 7
  %v795 = vsub.s32 1, %v794
  %v796 = vrot.slane %v651, %v795
  %v797 = vlaneseq
  %v798 = vshrl.u32 %v797, 7
  %v799 = vsub.s32 2, %v798
  %v800 = vrot.slane %v651, %v799
  %v801 = vlaneseq
  %v802 = vshrl.u32 %v801, 7
  %v803 = vsub.s32 3, %v802
  %v804 = vrot.slane %v651, %v803
  %vm809 = vcmask 900096
  %v811 = vsel %vm809, %v622, 0
  %vm813 = vcmask 1046528
  %v815 = vsel %vm813, %v760, 0
  %v818 = vsel %vm813, %v761, 0
  %v821 = vsel %vm813, %v762, 0
  %v824 = vsel %vm813, %v763, 0
  %826 = vmatprep.subr.bf16.mxu0 0
  %827 = vmatpush1.bf16.msra.mxu0 0
  %828 = vmatprep.subr.bf16.mxu0 %v818
  %829 = vmatpush1.bf16.msra.mxu0 %v815
  %830 = vmatprep.subr.bf16.mxu0 %v757
  %831 = vmatpush1.bf16.msra.mxu0 %v756
  %832 = vmatprep.subr.bf16.mxu0 %v753
  %833 = vmatpush1.bf16.msra.mxu0 %v752
  %834 = vmatprep.subr.bf16.mxu0 %v749
  %835 = vmatpush1.bf16.msra.mxu0 %v748
  %836 = vmatprep.subr.bf16.mxu0 %v745
  %837 = vmatpush1.bf16.msra.mxu0 %v744
  %838 = vmatprep.subr.bf16.mxu0 %v741
  %839 = vmatpush1.bf16.msra.mxu0 %v740
  %840 = vmatprep.subr.bf16.mxu0 %v737
  %841 = vmatpush1.bf16.msra.mxu0 %v736
  %842 = vmatprep.subr.bf16.mxu0 0
  %843 = vmatpush2.bf16.msra.mxu0 0
  %844 = vmatprep.subr.bf16.mxu0 0
  %845 = vmatpush2.bf16.msra.mxu0 0
  %846 = vmatprep.subr.bf16.mxu0 0
  %847 = vmatpush2.bf16.msra.mxu0 0
  %848 = vmatprep.subr.bf16.mxu0 0
  %849 = vmatpush2.bf16.msra.mxu0 0
  %850 = vmatprep.subr.bf16.mxu0 0
  %851 = vmatpush2.bf16.msra.mxu0 0
  %852 = vmatprep.subr.bf16.mxu0 0
  %853 = vmatpush2.bf16.msra.mxu0 0
  %854 = vmatprep.subr.bf16.mxu0 0
  %855 = vmatpush2.bf16.msra.mxu0 0
  %856 = vmatprep.subr.bf16.mxu0 0
  %857 = vmatpush2.bf16.msra.mxu0 0
  %858 = vmatprep.mubr.bf16.mxu0 0
  %859 = vmatmul.mubr.bf16.gmra.mxu0 %v811
  %v860 = vpop.f32.mrf.mxu0
  %v861 = vadd.f32 %v792, %v860
  %v862 = vpop.f32.mrf.mxu0
  %v863 = vadd.f32 %v796, %v862
  %v864 = vpop.f32.mrf.mxu0
  %v865 = vpop.f32.mrf.mxu0
  %866 = vdwg.mxu0
  %867 = vmatprep.subr.bf16.mxu0 0
  %868 = vmatpush1.bf16.msra.mxu0 0
  %869 = vmatprep.subr.bf16.mxu0 %v824
  %870 = vmatpush1.bf16.msra.mxu0 %v821
  %871 = vmatprep.subr.bf16.mxu0 %v759
  %872 = vmatpush1.bf16.msra.mxu0 %v758
  %873 = vmatprep.subr.bf16.mxu0 %v755
  %874 = vmatpush1.bf16.msra.mxu0 %v754
  %875 = vmatprep.subr.bf16.mxu0 %v751
  %876 = vmatpush1.bf16.msra.mxu0 %v750
  %877 = vmatprep.subr.bf16.mxu0 %v747
  %878 = vmatpush1.bf16.msra.mxu0 %v746
  %879 = vmatprep.subr.bf16.mxu0 %v743
  %880 = vmatpush1.bf16.msra.mxu0 %v742
  %881 = vmatprep.subr.bf16.mxu0 %v739
  %882 = vmatpush1.bf16.msra.mxu0 %v738
  %883 = vmatprep.subr.bf16.mxu0 0
  %884 = vmatpush2.bf16.msra.mxu0 0
  %885 = vmatprep.subr.bf16.mxu0 0
  %886 = vmatpush2.bf16.msra.mxu0 0
  %887 = vmatprep.subr.bf16.mxu0 0
  %888 = vmatpush2.bf16.msra.mxu0 0
  %889 = vmatprep.subr.bf16.mxu0 0
  %890 = vmatpush2.bf16.msra.mxu0 0
  %891 = vmatprep.subr.bf16.mxu0 0
  %892 = vmatpush2.bf16.msra.mxu0 0
  %893 = vmatprep.subr.bf16.mxu0 0
  %894 = vmatpush2.bf16.msra.mxu0 0
  %895 = vmatprep.subr.bf16.mxu0 0
  %896 = vmatpush2.bf16.msra.mxu0 0
  %897 = vmatprep.subr.bf16.mxu0 0
  %898 = vmatpush2.bf16.msra.mxu0 0
  %899 = vmatprep.mubr.bf16.mxu0 0
  %900 = vmatmul.mubr.bf16.gmra.mxu0 %v811
  %v901 = vpop.f32.mrf.mxu0
  %v902 = vadd.f32 %v800, %v901
  %v903 = vpop.f32.mrf.mxu0
  %v904 = vadd.f32 %v804, %v903
  %v905 = vpop.f32.mrf.mxu0
  %v906 = vpop.f32.mrf.mxu0
  %907 = vdwg.mxu0
  %v908 = vxor.u32 %v861, 2147483648
  %v909 = vxor.u32 %v863, 2147483648
  %v910 = vxor.u32 %v902, 2147483648
  %v911 = vxor.u32 %v904, 2147483648
  %v912 = vmul.f32 %v908, 1.442695
  %v913 = vpow.pop %v912
  %v914 = vmul.f32 %v909, 1.442695
  %v915 = vpow.pop %v914
  %v916 = vmul.f32 %v910, 1.442695
  %v917 = vpow.pop %v916
  %v918 = vmul.f32 %v911, 1.442695
  %v919 = vpow.pop %v918
  %v920 = vadd.f32 %v913, 1.0
  %v921 = vadd.f32 %v915, 1.0
  %v922 = vadd.f32 %v917, 1.0
  %v923 = vadd.f32 %v919, 1.0
  %v924 = vrcp.pop %v920
  %v925 = vmul.f32 1.0, %v924
  %v926 = vrcp.pop %v921
  %v927 = vmul.f32 1.0, %v926
  %v928 = vrcp.pop %v922
  %v929 = vmul.f32 1.0, %v928
  %v930 = vrcp.pop %v923
  %v931 = vmul.f32 1.0, %v930
  %s932 = smul.u32 4, 55
  %s933 = smul.u32 %s932, 4
  %s934 = sshll.u32 %s933, 4
  %935 = dma.done [#allocation3], %s934
  %v936 = vld [vmem:[#allocation2] sm:$0xff]
  %v937 = vld [vmem:[#allocation2 + $0x8] sm:$0xff]
  %v938 = vld [vmem:[#allocation2 + $0x10] sm:$0xff]
  %v939 = vld [vmem:[#allocation2 + $0x18] sm:$0xff]
  %v940 = vld [vmem:[#allocation2 + $0x20] sm:$0xff]
  %v941 = vld [vmem:[#allocation2 + $0x28] sm:$0xff]
  %v942 = vld [vmem:[#allocation2 + $0x30] sm:$0xff]
  %v943 = vld [vmem:[#allocation2 + $0x38] sm:$0xff]
  %v944 = vld [vmem:[#allocation2 + $0x40] sm:$0xff]
  %v945 = vld [vmem:[#allocation2 + $0x48] sm:$0xff]
  %v946 = vld [vmem:[#allocation2 + $0x50] sm:$0xff]
  %v947 = vld [vmem:[#allocation2 + $0x58] sm:$0xff]
  %v948 = vld [vmem:[#allocation2 + $0x60] sm:$0xff]
  %v949 = vld [vmem:[#allocation2 + $0x68] sm:$0xff]
  %v950 = vld [vmem:[#allocation2 + $0x70] sm:$0xff]
  %v951 = vld [vmem:[#allocation2 + $0x78] sm:$0xff]
  %v952 = vld [vmem:[#allocation2 + $0x80] sm:$0xff]
  %v953 = vld [vmem:[#allocation2 + $0x88] sm:$0xff]
  %v954 = vld [vmem:[#allocation2 + $0x90] sm:$0xff]
  %v955 = vld [vmem:[#allocation2 + $0x98] sm:$0xff]
  %v956 = vld [vmem:[#allocation2 + $0xa0] sm:$0xff]
  %v957 = vld [vmem:[#allocation2 + $0xa8] sm:$0xff]
  %v958 = vld [vmem:[#allocation2 + $0xb0] sm:$0xff]
  %v959 = vld [vmem:[#allocation2 + $0xb8] sm:$0xff]
  %v960 = vld [vmem:[#allocation2 + $0xc0] sm:$0xff]
  %v961 = vld [vmem:[#allocation2 + $0xc8] sm:$0xff]
  %v962 = vld [vmem:[#allocation2 + $0xd0] sm:$0xff]
  %v963 = vld [vmem:[#allocation2 + $0xd8] sm:$0xff]
  %v964 = vld [vmem:[#allocation2 + $0xe0] sm:$0xff]
  %v965 = vld [vmem:[#allocation2 + $0xe8] sm:$0xff]
  %v966 = vld [vmem:[#allocation2 + $0xf0] sm:$0xff]
  %v967 = vld [vmem:[#allocation2 + $0xf8] sm:$0xff]
  %v968 = vld [vmem:[#allocation2 + $0x100] sm:$0xff]
  %v969 = vld [vmem:[#allocation2 + $0x108] sm:$0xff]
  %v970 = vld [vmem:[#allocation2 + $0x110] sm:$0xff]
  %v971 = vld [vmem:[#allocation2 + $0x118] sm:$0xff]
  %v972 = vld [vmem:[#allocation2 + $0x120] sm:$0xff]
  %v973 = vld [vmem:[#allocation2 + $0x128] sm:$0xff]
  %v974 = vld [vmem:[#allocation2 + $0x130] sm:$0xff]
  %v975 = vld [vmem:[#allocation2 + $0x138] sm:$0xff]
  %v976 = vld [vmem:[#allocation2 + $0x140] sm:$0xff]
  %v977 = vld [vmem:[#allocation2 + $0x148] sm:$0xff]
  %v978 = vld [vmem:[#allocation2 + $0x150] sm:$0xff]
  %v979 = vld [vmem:[#allocation2 + $0x158] sm:$0xff]
  %v980 = vld [vmem:[#allocation2 + $0x160] sm:$0xff]
  %v981 = vld [vmem:[#allocation2 + $0x168] sm:$0xff]
  %v982 = vld [vmem:[#allocation2 + $0x170] sm:$0xff]
  %v983 = vld [vmem:[#allocation2 + $0x178] sm:$0xff]
  %v984 = vld [vmem:[#allocation2 + $0x180] sm:$0xff]
  %v985 = vld [vmem:[#allocation2 + $0x188] sm:$0xff]
  %v986 = vld [vmem:[#allocation2 + $0x190] sm:$0xff]
  %v987 = vld [vmem:[#allocation2 + $0x198] sm:$0xff]
  %v988 = vld [vmem:[#allocation2 + $0x1a0] sm:$0xff]
  %v989 = vld [vmem:[#allocation2 + $0x1a8] sm:$0xff]
  %v990 = vld [vmem:[#allocation2 + $0x1b0] sm:$0xff]
  %v991 = vld [vmem:[#allocation2 + $0x1b8] sm:$0xff]
  %v992 = vld [vmem:[#allocation2 + $0x1c0] sm:$0xff]
  %v993 = vld [vmem:[#allocation2 + $0x1c8] sm:$0xff]
  %v994 = vld [vmem:[#allocation2 + $0x1d0] sm:$0xff]
  %v995 = vld [vmem:[#allocation2 + $0x1d8] sm:$0xff]
  %v996 = vld [vmem:[#allocation2 + $0x1e0] sm:$0xff]
  %v997 = vld [vmem:[#allocation2 + $0x1e8] sm:$0xff]
  %v998 = vld [vmem:[#allocation2 + $0x1f0] sm:$0xff]
  %v999 = vld [vmem:[#allocation2 + $0x1f8] sm:$0xff]
  %v1000 = vld [vmem:[#allocation2 + $0x200] sm:$0xff]
  %v1001 = vld [vmem:[#allocation2 + $0x208] sm:$0xff]
  %v1002 = vld [vmem:[#allocation2 + $0x210] sm:$0xff]
  %v1003 = vld [vmem:[#allocation2 + $0x218] sm:$0xff]
  %v1004 = vld [vmem:[#allocation2 + $0x220] sm:$0xff]
  %v1005 = vld [vmem:[#allocation2 + $0x228] sm:$0xff]
  %v1006 = vld [vmem:[#allocation2 + $0x230] sm:$0xff]
  %v1007 = vld [vmem:[#allocation2 + $0x238] sm:$0xff]
  %v1008 = vld [vmem:[#allocation2 + $0x240] sm:$0xff]
  %v1009 = vld [vmem:[#allocation2 + $0x248] sm:$0xff]
  %v1010 = vld [vmem:[#allocation2 + $0x250] sm:$0xff]
  %v1011 = vld [vmem:[#allocation2 + $0x258] sm:$0xff]
  %v1012 = vld [vmem:[#allocation2 + $0x260] sm:$0xff]
  %v1013 = vld [vmem:[#allocation2 + $0x268] sm:$0xff]
  %v1014 = vld [vmem:[#allocation2 + $0x270] sm:$0xff]
  %v1015 = vld [vmem:[#allocation2 + $0x278] sm:$0xff]
  %v1016 = vld [vmem:[#allocation2 + $0x280] sm:$0xff]
  %v1017 = vld [vmem:[#allocation2 + $0x288] sm:$0xff]
  %v1018 = vld [vmem:[#allocation2 + $0x290] sm:$0xff]
  %v1019 = vld [vmem:[#allocation2 + $0x298] sm:$0xff]
  %v1020 = vld [vmem:[#allocation2 + $0x2a0] sm:$0xff]
  %v1021 = vld [vmem:[#allocation2 + $0x2a8] sm:$0xff]
  %v1022 = vld [vmem:[#allocation2 + $0x2b0] sm:$0xff]
  %v1023 = vld [vmem:[#allocation2 + $0x2b8] sm:$0xff]
  %v1024 = vld [vmem:[#allocation2 + $0x2c0] sm:$0xff]
  %v1025 = vld [vmem:[#allocation2 + $0x2c8] sm:$0xff]
  %v1026 = vld [vmem:[#allocation2 + $0x2d0] sm:$0xff]
  %v1027 = vld [vmem:[#allocation2 + $0x2d8] sm:$0xff]
  %v1028 = vld [vmem:[#allocation2 + $0x2e0] sm:$0xff]
  %v1029 = vld [vmem:[#allocation2 + $0x2e8] sm:$0xff]
  %v1030 = vld [vmem:[#allocation2 + $0x2f0] sm:$0xff]
  %v1031 = vld [vmem:[#allocation2 + $0x2f8] sm:$0xff]
  %v1032 = vld [vmem:[#allocation2 + $0x300] sm:$0xff]
  %v1033 = vld [vmem:[#allocation2 + $0x308] sm:$0xff]
  %v1034 = vld [vmem:[#allocation2 + $0x310] sm:$0xff]
  %v1035 = vld [vmem:[#allocation2 + $0x318] sm:$0xff]
  %v1036 = vld [vmem:[#allocation2 + $0x320] sm:$0xff]
  %v1037 = vld [vmem:[#allocation2 + $0x328] sm:$0xff]
  %v1038 = vld [vmem:[#allocation2 + $0x330] sm:$0xff]
  %v1039 = vld [vmem:[#allocation2 + $0x338] sm:$0xff]
  %v1040 = vld [vmem:[#allocation2 + $0x340] sm:$0xff]
  %v1041 = vld [vmem:[#allocation2 + $0x348] sm:$0xff]
  %v1042 = vld [vmem:[#allocation2 + $0x350] sm:$0xff]
  %v1043 = vld [vmem:[#allocation2 + $0x358] sm:$0xff]
  %v1044 = vld [vmem:[#allocation2 + $0x360] sm:$0xff]
  %v1045 = vld [vmem:[#allocation2 + $0x368] sm:$0xff]
  %v1046 = vpack.c.bf16 %v925, %v925
  %v1047 = vpack.c.bf16 %v927, %v927
  %v1048 = vpack.c.bf16 %v929, %v929
  %v1049 = vpack.c.bf16 %v931, %v931
  %v1051 = vpack.i.b16 %v1046, %v1046
  %v1053 = vlaneseq
  %v1054 = vshrl.u32 %v1053, 7
  %v1055 = vsub.s32 0, %v1054
  %v1056 = vrot.slane %v1051, %v1055
  %v1058 = vpack.i.b16 %v1047, %v1047
  %v1060 = vlaneseq
  %v1061 = vshrl.u32 %v1060, 7
  %v1062 = vsub.s32 0, %v1061
  %v1063 = vrot.slane %v1058, %v1062
  %v1065 = vpack.i.b16 %v1048, %v1048
  %v1067 = vlaneseq
  %v1068 = vshrl.u32 %v1067, 7
  %v1069 = vsub.s32 0, %v1068
  %v1070 = vrot.slane %v1065, %v1069
  %v1072 = vpack.i.b16 %v1049, %v1049
  %v1074 = vlaneseq
  %v1075 = vshrl.u32 %v1074, 7
  %v1076 = vsub.s32 0, %v1075
  %v1077 = vrot.slane %v1072, %v1076
  %v1082 = vunpack.c.l.b16 %v1056
  %v1083 = vunpack.c.l.b16 %v1063
  %v1084 = vunpack.c.l.b16 %v1070
  %v1085 = vunpack.c.l.b16 %v1077
  %v1086 = vpack.c.b16 %v1083, %v1082
  %v1087 = vpack.c.b16 %v1085, %v1084
  %v1090 = vmul.bf16 %v936, %v1086
  %v1091 = vmul.bf16 %v937, %v1087
  %v1092 = vmul.bf16 %v938, %v1086
  %v1093 = vmul.bf16 %v939, %v1087
  %v1094 = vmul.bf16 %v940, %v1086
  %v1095 = vmul.bf16 %v941, %v1087
  %v1096 = vmul.bf16 %v942, %v1086
  %v1097 = vmul.bf16 %v943, %v1087
  %v1098 = vmul.bf16 %v944, %v1086
  %v1099 = vmul.bf16 %v945, %v1087
  %v1100 = vmul.bf16 %v946, %v1086
  %v1101 = vmul.bf16 %v947, %v1087
  %v1102 = vmul.bf16 %v948, %v1086
  %v1103 = vmul.bf16 %v949, %v1087
  %v1104 = vmul.bf16 %v950, %v1086
  %v1105 = vmul.bf16 %v951, %v1087
  %v1106 = vmul.bf16 %v952, %v1086
  %v1107 = vmul.bf16 %v953, %v1087
  %v1108 = vmul.bf16 %v954, %v1086
  %v1109 = vmul.bf16 %v955, %v1087
  %v1110 = vmul.bf16 %v956, %v1086
  %v1111 = vmul.bf16 %v957, %v1087
  %v1112 = vmul.bf16 %v958, %v1086
  %v1113 = vmul.bf16 %v959, %v1087
  %v1114 = vmul.bf16 %v960, %v1086
  %v1115 = vmul.bf16 %v961, %v1087
  %v1116 = vmul.bf16 %v962, %v1086
  %v1117 = vmul.bf16 %v963, %v1087
  %v1118 = vmul.bf16 %v964, %v1086
  %v1119 = vmul.bf16 %v965, %v1087
  %v1120 = vmul.bf16 %v966, %v1086
  %v1121 = vmul.bf16 %v967, %v1087
  %v1122 = vmul.bf16 %v968, %v1086
  %v1123 = vmul.bf16 %v969, %v1087
  %v1124 = vmul.bf16 %v970, %v1086
  %v1125 = vmul.bf16 %v971, %v1087
  %v1126 = vmul.bf16 %v972, %v1086
  %v1127 = vmul.bf16 %v973, %v1087
  %v1128 = vmul.bf16 %v974, %v1086
  %v1129 = vmul.bf16 %v975, %v1087
  %v1130 = vmul.bf16 %v976, %v1086
  %v1131 = vmul.bf16 %v977, %v1087
  %v1132 = vmul.bf16 %v978, %v1086
  %v1133 = vmul.bf16 %v979, %v1087
  %v1134 = vmul.bf16 %v980, %v1086
  %v1135 = vmul.bf16 %v981, %v1087
  %v1136 = vmul.bf16 %v982, %v1086
  %v1137 = vmul.bf16 %v983, %v1087
  %v1138 = vmul.bf16 %v984, %v1086
  %v1139 = vmul.bf16 %v985, %v1087
  %v1140 = vmul.bf16 %v986, %v1086
  %v1141 = vmul.bf16 %v987, %v1087
  %v1142 = vmul.bf16 %v988, %v1086
  %v1143 = vmul.bf16 %v989, %v1087
  %v1144 = vmul.bf16 %v990, %v1086
  %v1145 = vmul.bf16 %v991, %v1087
  %v1146 = vmul.bf16 %v992, %v1086
  %v1147 = vmul.bf16 %v993, %v1087
  %v1148 = vmul.bf16 %v994, %v1086
  %v1149 = vmul.bf16 %v995, %v1087
  %v1150 = vmul.bf16 %v996, %v1086
  %v1151 = vmul.bf16 %v997, %v1087
  %v1152 = vmul.bf16 %v998, %v1086
  %v1153 = vmul.bf16 %v999, %v1087
  %v1154 = vmul.bf16 %v1000, %v1086
  %v1155 = vmul.bf16 %v1001, %v1087
  %v1156 = vmul.bf16 %v1002, %v1086
  %v1157 = vmul.bf16 %v1003, %v1087
  %v1158 = vmul.bf16 %v1004, %v1086
  %v1159 = vmul.bf16 %v1005, %v1087
  %v1160 = vmul.bf16 %v1006, %v1086
  %v1161 = vmul.bf16 %v1007, %v1087
  %v1162 = vmul.bf16 %v1008, %v1086
  %v1163 = vmul.bf16 %v1009, %v1087
  %v1164 = vmul.bf16 %v1010, %v1086
  %v1165 = vmul.bf16 %v1011, %v1087
  %v1166 = vmul.bf16 %v1012, %v1086
  %v1167 = vmul.bf16 %v1013, %v1087
  %v1168 = vmul.bf16 %v1014, %v1086
  %v1169 = vmul.bf16 %v1015, %v1087
  %v1170 = vmul.bf16 %v1016, %v1086
  %v1171 = vmul.bf16 %v1017, %v1087
  %v1172 = vmul.bf16 %v1018, %v1086
  %v1173 = vmul.bf16 %v1019, %v1087
  %v1174 = vmul.bf16 %v1020, %v1086
  %v1175 = vmul.bf16 %v1021, %v1087
  %v1176 = vmul.bf16 %v1022, %v1086
  %v1177 = vmul.bf16 %v1023, %v1087
  %v1178 = vmul.bf16 %v1024, %v1086
  %v1179 = vmul.bf16 %v1025, %v1087
  %v1180 = vmul.bf16 %v1026, %v1086
  %v1181 = vmul.bf16 %v1027, %v1087
  %v1182 = vmul.bf16 %v1028, %v1086
  %v1183 = vmul.bf16 %v1029, %v1087
  %v1184 = vmul.bf16 %v1030, %v1086
  %v1185 = vmul.bf16 %v1031, %v1087
  %v1186 = vmul.bf16 %v1032, %v1086
  %v1187 = vmul.bf16 %v1033, %v1087
  %v1188 = vmul.bf16 %v1034, %v1086
  %v1189 = vmul.bf16 %v1035, %v1087
  %v1190 = vmul.bf16 %v1036, %v1086
  %v1191 = vmul.bf16 %v1037, %v1087
  %v1192 = vmul.bf16 %v1038, %v1086
  %v1193 = vmul.bf16 %v1039, %v1087
  %v1194 = vmul.bf16 %v1040, %v1086
  %v1195 = vmul.bf16 %v1041, %v1087
  %v1196 = vmul.bf16 %v1042, %v1086
  %v1197 = vmul.bf16 %v1043, %v1087
  %v1198 = vmul.bf16 %v1044, %v1086
  %v1199 = vmul.bf16 %v1045, %v1087
  %v1200 = vld [vmem:[%s1] sm:$0xff]
  %v1201 = vld [vmem:[%s1 + $0x8] sm:$0xff]
  %v1202 = vld [vmem:[%s1 + $0x10] sm:$0xff]
  %v1203 = vld [vmem:[%s1 + $0x18] sm:$0xff]
  %v1204 = vld [vmem:[%s1 + $0x20] sm:$0xff]
  %v1205 = vld [vmem:[%s1 + $0x28] sm:$0xff]
  %v1206 = vld [vmem:[%s1 + $0x30] sm:$0xff]
  %v1207 = vld [vmem:[%s1 + $0x38] sm:$0xff]
  %v1208 = vld [vmem:[%s1 + $0x40] sm:$0xff]
  %v1209 = vld [vmem:[%s1 + $0x48] sm:$0xff]
  %v1210 = vld [vmem:[%s1 + $0x50] sm:$0xff]
  %v1211 = vld [vmem:[%s1 + $0x58] sm:$0xff]
  %v1212 = vld [vmem:[%s1 + $0x60] sm:$0xff]
  %v1213 = vld [vmem:[%s1 + $0x68] sm:$0xff]
  %v1214 = vld [vmem:[%s1 + $0x70] sm:$0xff]
  %v1215 = vld [vmem:[%s1 + $0x78] sm:$0xff]
  %v1216 = vld [vmem:[%s1 + $0x80] sm:$0xff]
  %v1217 = vld [vmem:[%s1 + $0x88] sm:$0xff]
  %v1218 = vld [vmem:[%s1 + $0x90] sm:$0xff]
  %v1219 = vld [vmem:[%s1 + $0x98] sm:$0xff]
  %v1220 = vld [vmem:[%s1 + $0xa0] sm:$0xff]
  %v1221 = vld [vmem:[%s1 + $0xa8] sm:$0xff]
  %v1222 = vld [vmem:[%s1 + $0xb0] sm:$0xff]
  %v1223 = vld [vmem:[%s1 + $0xb8] sm:$0xff]
  %v1224 = vld [vmem:[%s1 + $0xc0] sm:$0xff]
  %v1225 = vld [vmem:[%s1 + $0xc8] sm:$0xff]
  %v1226 = vld [vmem:[%s1 + $0xd0] sm:$0xff]
  %v1227 = vld [vmem:[%s1 + $0xd8] sm:$0xff]
  %v1228 = vld [vmem:[%s1 + $0xe0] sm:$0xff]
  %v1229 = vld [vmem:[%s1 + $0xe8] sm:$0xff]
  %v1230 = vld [vmem:[%s1 + $0xf0] sm:$0xff]
  %v1231 = vld [vmem:[%s1 + $0xf8] sm:$0xff]
  %v1232 = vld [vmem:[%s1 + $0x100] sm:$0xff]
  %v1233 = vld [vmem:[%s1 + $0x108] sm:$0xff]
  %v1234 = vld [vmem:[%s1 + $0x110] sm:$0xff]
  %v1235 = vld [vmem:[%s1 + $0x118] sm:$0xff]
  %v1236 = vld [vmem:[%s1 + $0x120] sm:$0xff]
  %v1237 = vld [vmem:[%s1 + $0x128] sm:$0xff]
  %v1238 = vld [vmem:[%s1 + $0x130] sm:$0xff]
  %v1239 = vld [vmem:[%s1 + $0x138] sm:$0xff]
  %v1240 = vld [vmem:[%s1 + $0x140] sm:$0xff]
  %v1241 = vld [vmem:[%s1 + $0x148] sm:$0xff]
  %v1242 = vld [vmem:[%s1 + $0x150] sm:$0xff]
  %v1243 = vld [vmem:[%s1 + $0x158] sm:$0xff]
  %v1244 = vld [vmem:[%s1 + $0x160] sm:$0xff]
  %v1245 = vld [vmem:[%s1 + $0x168] sm:$0xff]
  %v1246 = vld [vmem:[%s1 + $0x170] sm:$0xff]
  %v1247 = vld [vmem:[%s1 + $0x178] sm:$0xff]
  %v1248 = vld [vmem:[%s1 + $0x180] sm:$0xff]
  %v1249 = vld [vmem:[%s1 + $0x188] sm:$0xff]
  %v1250 = vld [vmem:[%s1 + $0x190] sm:$0xff]
  %v1251 = vld [vmem:[%s1 + $0x198] sm:$0xff]
  %v1252 = vld [vmem:[%s1 + $0x1a0] sm:$0xff]
  %v1253 = vld [vmem:[%s1 + $0x1a8] sm:$0xff]
  %v1254 = vld [vmem:[%s1 + $0x1b0] sm:$0xff]
  %v1255 = vpack.c.bf16 %v1201, %v1200
  %v1256 = vpack.c.bf16 %v1203, %v1202
  %v1257 = vpack.c.bf16 %v1205, %v1204
  %v1258 = vpack.c.bf16 %v1207, %v1206
  %v1259 = vpack.c.bf16 %v1209, %v1208
  %v1260 = vpack.c.bf16 %v1211, %v1210
  %v1261 = vpack.c.bf16 %v1213, %v1212
  %v1262 = vpack.c.bf16 %v1215, %v1214
  %v1263 = vpack.c.bf16 %v1217, %v1216
  %v1264 = vpack.c.bf16 %v1219, %v1218
  %v1265 = vpack.c.bf16 %v1221, %v1220
  %v1266 = vpack.c.bf16 %v1223, %v1222
  %v1267 = vpack.c.bf16 %v1225, %v1224
  %v1268 = vpack.c.bf16 %v1227, %v1226
  %v1269 = vpack.c.bf16 %v1229, %v1228
  %v1270 = vpack.c.bf16 %v1231, %v1230
  %v1271 = vpack.c.bf16 %v1233, %v1232
  %v1272 = vpack.c.bf16 %v1235, %v1234
  %v1273 = vpack.c.bf16 %v1237, %v1236
  %v1274 = vpack.c.bf16 %v1239, %v1238
  %v1275 = vpack.c.bf16 %v1241, %v1240
  %v1276 = vpack.c.bf16 %v1243, %v1242
  %v1277 = vpack.c.bf16 %v1245, %v1244
  %v1278 = vpack.c.bf16 %v1247, %v1246
  %v1279 = vpack.c.bf16 %v1249, %v1248
  %v1280 = vpack.c.bf16 %v1251, %v1250
  %v1281 = vpack.c.bf16 %v1253, %v1252
  %v1282 = vpack.c.bf16 %v1254, %v1254
  %v1393 = vunpack.c.l.b16 %v1090
  %v1394 = vunpack.c.h.b16 %v1090
  %v1395 = vunpack.c.l.b16 %v1091
  %v1396 = vunpack.c.h.b16 %v1091
  %v1397 = vunpack.c.l.b16 %v1092
  %v1398 = vunpack.c.h.b16 %v1092
  %v1399 = vunpack.c.l.b16 %v1093
  %v1400 = vunpack.c.h.b16 %v1093
  %v1401 = vunpack.c.l.b16 %v1094
  %v1402 = vunpack.c.h.b16 %v1094
  %v1403 = vunpack.c.l.b16 %v1095
  %v1404 = vunpack.c.h.b16 %v1095
  %v1405 = vunpack.c.l.b16 %v1096
  %v1406 = vunpack.c.h.b16 %v1096
  %v1407 = vunpack.c.l.b16 %v1097
  %v1408 = vunpack.c.h.b16 %v1097
  %v1409 = vunpack.c.l.b16 %v1098
  %v1410 = vunpack.c.h.b16 %v1098
  %v1411 = vunpack.c.l.b16 %v1099
  %v1412 = vunpack.c.h.b16 %v1099
  %v1413 = vunpack.c.l.b16 %v1100
  %v1414 = vunpack.c.h.b16 %v1100
  %v1415 = vunpack.c.l.b16 %v1101
  %v1416 = vunpack.c.h.b16 %v1101
  %v1417 = vunpack.c.l.b16 %v1102
  %v1418 = vunpack.c.h.b16 %v1102
  %v1419 = vunpack.c.l.b16 %v1103
  %v1420 = vunpack.c.h.b16 %v1103
  %v1421 = vunpack.c.l.b16 %v1104
  %v1422 = vunpack.c.h.b16 %v1104
  %v1423 = vunpack.c.l.b16 %v1105
  %v1424 = vunpack.c.h.b16 %v1105
  %v1425 = vunpack.c.l.b16 %v1106
  %v1426 = vunpack.c.h.b16 %v1106
  %v1427 = vunpack.c.l.b16 %v1107
  %v1428 = vunpack.c.h.b16 %v1107
  %v1429 = vunpack.c.l.b16 %v1108
  %v1430 = vunpack.c.h.b16 %v1108
  %v1431 = vunpack.c.l.b16 %v1109
  %v1432 = vunpack.c.h.b16 %v1109
  %v1433 = vunpack.c.l.b16 %v1110
  %v1434 = vunpack.c.h.b16 %v1110
  %v1435 = vunpack.c.l.b16 %v1111
  %v1436 = vunpack.c.h.b16 %v1111
  %v1437 = vunpack.c.l.b16 %v1112
  %v1438 = vunpack.c.h.b16 %v1112
  %v1439 = vunpack.c.l.b16 %v1113
  %v1440 = vunpack.c.h.b16 %v1113
  %v1441 = vunpack.c.l.b16 %v1114
  %v1442 = vunpack.c.h.b16 %v1114
  %v1443 = vunpack.c.l.b16 %v1115
  %v1444 = vunpack.c.h.b16 %v1115
  %v1445 = vunpack.c.l.b16 %v1116
  %v1446 = vunpack.c.h.b16 %v1116
  %v1447 = vunpack.c.l.b16 %v1117
  %v1448 = vunpack.c.h.b16 %v1117
  %v1449 = vunpack.c.l.b16 %v1118
  %v1450 = vunpack.c.h.b16 %v1118
  %v1451 = vunpack.c.l.b16 %v1119
  %v1452 = vunpack.c.h.b16 %v1119
  %v1453 = vunpack.c.l.b16 %v1120
  %v1454 = vunpack.c.h.b16 %v1120
  %v1455 = vunpack.c.l.b16 %v1121
  %v1456 = vunpack.c.h.b16 %v1121
  %v1457 = vunpack.c.l.b16 %v1122
  %v1458 = vunpack.c.h.b16 %v1122
  %v1459 = vunpack.c.l.b16 %v1123
  %v1460 = vunpack.c.h.b16 %v1123
  %v1461 = vunpack.c.l.b16 %v1124
  %v1462 = vunpack.c.h.b16 %v1124
  %v1463 = vunpack.c.l.b16 %v1125
  %v1464 = vunpack.c.h.b16 %v1125
  %v1465 = vunpack.c.l.b16 %v1126
  %v1466 = vunpack.c.h.b16 %v1126
  %v1467 = vunpack.c.l.b16 %v1127
  %v1468 = vunpack.c.h.b16 %v1127
  %v1469 = vunpack.c.l.b16 %v1128
  %v1470 = vunpack.c.h.b16 %v1128
  %v1471 = vunpack.c.l.b16 %v1129
  %v1472 = vunpack.c.h.b16 %v1129
  %v1473 = vunpack.c.l.b16 %v1130
  %v1474 = vunpack.c.h.b16 %v1130
  %v1475 = vunpack.c.l.b16 %v1131
  %v1476 = vunpack.c.h.b16 %v1131
  %v1477 = vunpack.c.l.b16 %v1132
  %v1478 = vunpack.c.h.b16 %v1132
  %v1479 = vunpack.c.l.b16 %v1133
  %v1480 = vunpack.c.h.b16 %v1133
  %v1481 = vunpack.c.l.b16 %v1134
  %v1482 = vunpack.c.h.b16 %v1134
  %v1483 = vunpack.c.l.b16 %v1135
  %v1484 = vunpack.c.h.b16 %v1135
  %v1485 = vunpack.c.l.b16 %v1136
  %v1486 = vunpack.c.h.b16 %v1136
  %v1487 = vunpack.c.l.b16 %v1137
  %v1488 = vunpack.c.h.b16 %v1137
  %v1489 = vunpack.c.l.b16 %v1138
  %v1490 = vunpack.c.h.b16 %v1138
  %v1491 = vunpack.c.l.b16 %v1139
  %v1492 = vunpack.c.h.b16 %v1139
  %v1493 = vunpack.c.l.b16 %v1140
  %v1494 = vunpack.c.h.b16 %v1140
  %v1495 = vunpack.c.l.b16 %v1141
  %v1496 = vunpack.c.h.b16 %v1141
  %v1497 = vunpack.c.l.b16 %v1142
  %v1498 = vunpack.c.h.b16 %v1142
  %v1499 = vunpack.c.l.b16 %v1143
  %v1500 = vunpack.c.h.b16 %v1143
  %v1501 = vunpack.c.l.b16 %v1144
  %v1502 = vunpack.c.h.b16 %v1144
  %v1503 = vunpack.c.l.b16 %v1145
  %v1504 = vunpack.c.h.b16 %v1145
  %v1505 = vunpack.c.l.b16 %v1146
  %v1506 = vunpack.c.h.b16 %v1146
  %v1507 = vunpack.c.l.b16 %v1147
  %v1508 = vunpack.c.h.b16 %v1147
  %v1509 = vunpack.c.l.b16 %v1148
  %v1510 = vunpack.c.h.b16 %v1148
  %v1511 = vunpack.c.l.b16 %v1149
  %v1512 = vunpack.c.h.b16 %v1149
  %v1513 = vunpack.c.l.b16 %v1150
  %v1514 = vunpack.c.h.b16 %v1150
  %v1515 = vunpack.c.l.b16 %v1151
  %v1516 = vunpack.c.h.b16 %v1151
  %v1517 = vunpack.c.l.b16 %v1152
  %v1518 = vunpack.c.h.b16 %v1152
  %v1519 = vunpack.c.l.b16 %v1153
  %v1520 = vunpack.c.h.b16 %v1153
  %v1521 = vunpack.c.l.b16 %v1154
  %v1522 = vunpack.c.h.b16 %v1154
  %v1523 = vunpack.c.l.b16 %v1155
  %v1524 = vunpack.c.h.b16 %v1155
  %v1525 = vunpack.c.l.b16 %v1156
  %v1526 = vunpack.c.h.b16 %v1156
  %v1527 = vunpack.c.l.b16 %v1157
  %v1528 = vunpack.c.h.b16 %v1157
  %v1529 = vunpack.c.l.b16 %v1158
  %v1530 = vunpack.c.h.b16 %v1158
  %v1531 = vunpack.c.l.b16 %v1159
  %v1532 = vunpack.c.h.b16 %v1159
  %v1533 = vunpack.c.l.b16 %v1160
  %v1534 = vunpack.c.h.b16 %v1160
  %v1535 = vunpack.c.l.b16 %v1161
  %v1536 = vunpack.c.h.b16 %v1161
  %v1537 = vunpack.c.l.b16 %v1162
  %v1538 = vunpack.c.h.b16 %v1162
  %v1539 = vunpack.c.l.b16 %v1163
  %v1540 = vunpack.c.h.b16 %v1163
  %v1541 = vunpack.c.l.b16 %v1164
  %v1542 = vunpack.c.h.b16 %v1164
  %v1543 = vunpack.c.l.b16 %v1165
  %v1544 = vunpack.c.h.b16 %v1165
  %v1545 = vunpack.c.l.b16 %v1166
  %v1546 = vunpack.c.h.b16 %v1166
  %v1547 = vunpack.c.l.b16 %v1167
  %v1548 = vunpack.c.h.b16 %v1167
  %v1549 = vunpack.c.l.b16 %v1168
  %v1550 = vunpack.c.h.b16 %v1168
  %v1551 = vunpack.c.l.b16 %v1169
  %v1552 = vunpack.c.h.b16 %v1169
  %v1553 = vunpack.c.l.b16 %v1170
  %v1554 = vunpack.c.h.b16 %v1170
  %v1555 = vunpack.c.l.b16 %v1171
  %v1556 = vunpack.c.h.b16 %v1171
  %v1557 = vunpack.c.l.b16 %v1172
  %v1558 = vunpack.c.h.b16 %v1172
  %v1559 = vunpack.c.l.b16 %v1173
  %v1560 = vunpack.c.h.b16 %v1173
  %v1561 = vunpack.c.l.b16 %v1174
  %v1562 = vunpack.c.h.b16 %v1174
  %v1563 = vunpack.c.l.b16 %v1175
  %v1564 = vunpack.c.h.b16 %v1175
  %v1565 = vunpack.c.l.b16 %v1176
  %v1566 = vunpack.c.h.b16 %v1176
  %v1567 = vunpack.c.l.b16 %v1177
  %v1568 = vunpack.c.h.b16 %v1177
  %v1569 = vunpack.c.l.b16 %v1178
  %v1570 = vunpack.c.h.b16 %v1178
  %v1571 = vunpack.c.l.b16 %v1179
  %v1572 = vunpack.c.h.b16 %v1179
  %v1573 = vunpack.c.l.b16 %v1180
  %v1574 = vunpack.c.h.b16 %v1180
  %v1575 = vunpack.c.l.b16 %v1181
  %v1576 = vunpack.c.h.b16 %v1181
  %v1577 = vunpack.c.l.b16 %v1182
  %v1578 = vunpack.c.h.b16 %v1182
  %v1579 = vunpack.c.l.b16 %v1183
  %v1580 = vunpack.c.h.b16 %v1183
  %v1581 = vunpack.c.l.b16 %v1184
  %v1582 = vunpack.c.h.b16 %v1184
  %v1583 = vunpack.c.l.b16 %v1185
  %v1584 = vunpack.c.h.b16 %v1185
  %v1585 = vunpack.c.l.b16 %v1186
  %v1586 = vunpack.c.h.b16 %v1186
  %v1587 = vunpack.c.l.b16 %v1187
  %v1588 = vunpack.c.h.b16 %v1187
  %v1589 = vunpack.c.l.b16 %v1188
  %v1590 = vunpack.c.h.b16 %v1188
  %v1591 = vunpack.c.l.b16 %v1189
  %v1592 = vunpack.c.h.b16 %v1189
  %v1593 = vunpack.c.l.b16 %v1190
  %v1594 = vunpack.c.h.b16 %v1190
  %v1595 = vunpack.c.l.b16 %v1191
  %v1596 = vunpack.c.h.b16 %v1191
  %v1597 = vunpack.c.l.b16 %v1192
  %v1598 = vunpack.c.h.b16 %v1192
  %v1599 = vunpack.c.l.b16 %v1193
  %v1600 = vunpack.c.h.b16 %v1193
  %v1601 = vunpack.c.l.b16 %v1194
  %v1602 = vunpack.c.h.b16 %v1194
  %v1603 = vunpack.c.l.b16 %v1195
  %v1604 = vunpack.c.h.b16 %v1195
  %v1605 = vunpack.c.l.b16 %v1196
  %v1606 = vunpack.c.h.b16 %v1196
  %v1607 = vunpack.c.l.b16 %v1197
  %v1608 = vunpack.c.h.b16 %v1197
  %v1609 = vunpack.c.l.b16 %v1198
  %v1610 = vunpack.c.h.b16 %v1198
  %v1611 = vunpack.c.l.b16 %v1199
  %v1612 = vunpack.c.h.b16 %v1199
  %v1613 = vpack.c.b16 %v1397, %v1393
  %v1614 = vpack.c.b16 %v1398, %v1394
  %v1615 = vpack.c.b16 %v1399, %v1395
  %v1616 = vpack.c.b16 %v1400, %v1396
  %v1617 = vpack.c.b16 %v1405, %v1401
  %v1618 = vpack.c.b16 %v1406, %v1402
  %v1619 = vpack.c.b16 %v1407, %v1403
  %v1620 = vpack.c.b16 %v1408, %v1404
  %v1621 = vpack.c.b16 %v1413, %v1409
  %v1622 = vpack.c.b16 %v1414, %v1410
  %v1623 = vpack.c.b16 %v1415, %v1411
  %v1624 = vpack.c.b16 %v1416, %v1412
  %v1625 = vpack.c.b16 %v1421, %v1417
  %v1626 = vpack.c.b16 %v1422, %v1418
  %v1627 = vpack.c.b16 %v1423, %v1419
  %v1628 = vpack.c.b16 %v1424, %v1420
  %v1629 = vpack.c.b16 %v1429, %v1425
  %v1630 = vpack.c.b16 %v1430, %v1426
  %v1631 = vpack.c.b16 %v1431, %v1427
  %v1632 = vpack.c.b16 %v1432, %v1428
  %v1633 = vpack.c.b16 %v1437, %v1433
  %v1634 = vpack.c.b16 %v1438, %v1434
  %v1635 = vpack.c.b16 %v1439, %v1435
  %v1636 = vpack.c.b16 %v1440, %v1436
  %v1637 = vpack.c.b16 %v1445, %v1441
  %v1638 = vpack.c.b16 %v1446, %v1442
  %v1639 = vpack.c.b16 %v1447, %v1443
  %v1640 = vpack.c.b16 %v1448, %v1444
  %v1641 = vpack.c.b16 %v1453, %v1449
  %v1642 = vpack.c.b16 %v1454, %v1450
  %v1643 = vpack.c.b16 %v1455, %v1451
  %v1644 = vpack.c.b16 %v1456, %v1452
  %v1645 = vpack.c.b16 %v1461, %v1457
  %v1646 = vpack.c.b16 %v1462, %v1458
  %v1647 = vpack.c.b16 %v1463, %v1459
  %v1648 = vpack.c.b16 %v1464, %v1460
  %v1649 = vpack.c.b16 %v1469, %v1465
  %v1650 = vpack.c.b16 %v1470, %v1466
  %v1651 = vpack.c.b16 %v1471, %v1467
  %v1652 = vpack.c.b16 %v1472, %v1468
  %v1653 = vpack.c.b16 %v1477, %v1473
  %v1654 = vpack.c.b16 %v1478, %v1474
  %v1655 = vpack.c.b16 %v1479, %v1475
  %v1656 = vpack.c.b16 %v1480, %v1476
  %v1657 = vpack.c.b16 %v1485, %v1481
  %v1658 = vpack.c.b16 %v1486, %v1482
  %v1659 = vpack.c.b16 %v1487, %v1483
  %v1660 = vpack.c.b16 %v1488, %v1484
  %v1661 = vpack.c.b16 %v1493, %v1489
  %v1662 = vpack.c.b16 %v1494, %v1490
  %v1663 = vpack.c.b16 %v1495, %v1491
  %v1664 = vpack.c.b16 %v1496, %v1492
  %v1665 = vpack.c.b16 %v1501, %v1497
  %v1666 = vpack.c.b16 %v1502, %v1498
  %v1667 = vpack.c.b16 %v1503, %v1499
  %v1668 = vpack.c.b16 %v1504, %v1500
  %v1669 = vpack.c.b16 %v1509, %v1505
  %v1670 = vpack.c.b16 %v1510, %v1506
  %v1671 = vpack.c.b16 %v1511, %v1507
  %v1672 = vpack.c.b16 %v1512, %v1508
  %v1673 = vpack.c.b16 %v1517, %v1513
  %v1674 = vpack.c.b16 %v1518, %v1514
  %v1675 = vpack.c.b16 %v1519, %v1515
  %v1676 = vpack.c.b16 %v1520, %v1516
  %v1677 = vpack.c.b16 %v1525, %v1521
  %v1678 = vpack.c.b16 %v1526, %v1522
  %v1679 = vpack.c.b16 %v1527, %v1523
  %v1680 = vpack.c.b16 %v1528, %v1524
  %v1681 = vpack.c.b16 %v1533, %v1529
  %v1682 = vpack.c.b16 %v1534, %v1530
  %v1683 = vpack.c.b16 %v1535, %v1531
  %v1684 = vpack.c.b16 %v1536, %v1532
  %v1685 = vpack.c.b16 %v1541, %v1537
  %v1686 = vpack.c.b16 %v1542, %v1538
  %v1687 = vpack.c.b16 %v1543, %v1539
  %v1688 = vpack.c.b16 %v1544, %v1540
  %v1689 = vpack.c.b16 %v1549, %v1545
  %v1690 = vpack.c.b16 %v1550, %v1546
  %v1691 = vpack.c.b16 %v1551, %v1547
  %v1692 = vpack.c.b16 %v1552, %v1548
  %v1693 = vpack.c.b16 %v1557, %v1553
  %v1694 = vpack.c.b16 %v1558, %v1554
  %v1695 = vpack.c.b16 %v1559, %v1555
  %v1696 = vpack.c.b16 %v1560, %v1556
  %v1697 = vpack.c.b16 %v1565, %v1561
  %v1698 = vpack.c.b16 %v1566, %v1562
  %v1699 = vpack.c.b16 %v1567, %v1563
  %v1700 = vpack.c.b16 %v1568, %v1564
  %v1701 = vpack.c.b16 %v1573, %v1569
  %v1702 = vpack.c.b16 %v1574, %v1570
  %v1703 = vpack.c.b16 %v1575, %v1571
  %v1704 = vpack.c.b16 %v1576, %v1572
  %v1705 = vpack.c.b16 %v1581, %v1577
  %v1706 = vpack.c.b16 %v1582, %v1578
  %v1707 = vpack.c.b16 %v1583, %v1579
  %v1708 = vpack.c.b16 %v1584, %v1580
  %v1709 = vpack.c.b16 %v1589, %v1585
  %v1710 = vpack.c.b16 %v1590, %v1586
  %v1711 = vpack.c.b16 %v1591, %v1587
  %v1712 = vpack.c.b16 %v1592, %v1588
  %v1713 = vpack.c.b16 %v1597, %v1593
  %v1714 = vpack.c.b16 %v1598, %v1594
  %v1715 = vpack.c.b16 %v1599, %v1595
  %v1716 = vpack.c.b16 %v1600, %v1596
  %v1717 = vpack.c.b16 %v1605, %v1601
  %v1718 = vpack.c.b16 %v1606, %v1602
  %v1719 = vpack.c.b16 %v1607, %v1603
  %v1720 = vpack.c.b16 %v1608, %v1604
  %v1721 = vpack.c.b16 %v1609, %v1609
  %v1722 = vpack.c.b16 %v1610, %v1610
  %v1723 = vpack.c.b16 %v1611, %v1611
  %v1724 = vpack.c.b16 %v1612, %v1612
  %v1810 = vsel %vm533, %v1616, 0
  %v1813 = vsel %vm533, %v1620, 0
  %v1816 = vsel %vm533, %v1624, 0
  %v1819 = vsel %vm533, %v1628, 0
  %v1822 = vsel %vm533, %v1632, 0
  %v1825 = vsel %vm533, %v1636, 0
  %v1828 = vsel %vm533, %v1640, 0
  %v1831 = vsel %vm533, %v1644, 0
  %v1834 = vsel %vm533, %v1648, 0
  %v1837 = vsel %vm533, %v1652, 0
  %v1840 = vsel %vm533, %v1656, 0
  %v1843 = vsel %vm533, %v1660, 0
  %v1846 = vsel %vm533, %v1664, 0
  %v1849 = vsel %vm533, %v1668, 0
  %v1852 = vsel %vm533, %v1672, 0
  %v1855 = vsel %vm533, %v1676, 0
  %v1858 = vsel %vm533, %v1680, 0
  %v1861 = vsel %vm533, %v1684, 0
  %v1864 = vsel %vm533, %v1688, 0
  %v1867 = vsel %vm533, %v1692, 0
  %v1870 = vsel %vm533, %v1696, 0
  %v1873 = vsel %vm533, %v1700, 0
  %v1876 = vsel %vm533, %v1704, 0
  %v1879 = vsel %vm533, %v1708, 0
  %v1882 = vsel %vm533, %v1712, 0
  %v1885 = vsel %vm533, %v1716, 0
  %v1888 = vsel %vm533, %v1720, 0
  %v1891 = vsel %vm533, %v1724, 0
  %v1894 = vsel %vm537, %v1282, 0
  %1896 = vmatprep.subr.bf16.mxu0 0
  %1897 = vmatpush1.bf16.msra.mxu0 %v1262
  %1898 = vmatprep.subr.bf16.mxu0 0
  %1899 = vmatpush1.bf16.msra.mxu0 %v1261
  %1900 = vmatprep.subr.bf16.mxu0 0
  %1901 = vmatpush1.bf16.msra.mxu0 %v1260
  %1902 = vmatprep.subr.bf16.mxu0 0
  %1903 = vmatpush1.bf16.msra.mxu0 %v1259
  %1904 = vmatprep.subr.bf16.mxu0 0
  %1905 = vmatpush1.bf16.msra.mxu0 %v1258
  %1906 = vmatprep.subr.bf16.mxu0 0
  %1907 = vmatpush1.bf16.msra.mxu0 %v1257
  %1908 = vmatprep.subr.bf16.mxu0 0
  %1909 = vmatpush1.bf16.msra.mxu0 %v1256
  %1910 = vmatprep.subr.bf16.mxu0 0
  %1911 = vmatpush1.bf16.msra.mxu0 %v1255
  %1912 = vmatprep.subr.bf16.mxu0 0
  %1913 = vmatpush2.bf16.msra.mxu0 %v1270
  %1914 = vmatprep.subr.bf16.mxu0 0
  %1915 = vmatpush2.bf16.msra.mxu0 %v1269
  %1916 = vmatprep.subr.bf16.mxu0 0
  %1917 = vmatpush2.bf16.msra.mxu0 %v1268
  %1918 = vmatprep.subr.bf16.mxu0 0
  %1919 = vmatpush2.bf16.msra.mxu0 %v1267
  %1920 = vmatprep.subr.bf16.mxu0 0
  %1921 = vmatpush2.bf16.msra.mxu0 %v1266
  %1922 = vmatprep.subr.bf16.mxu0 0
  %1923 = vmatpush2.bf16.msra.mxu0 %v1265
  %1924 = vmatprep.subr.bf16.mxu0 0
  %1925 = vmatpush2.bf16.msra.mxu0 %v1264
  %1926 = vmatprep.subr.bf16.mxu0 0
  %1927 = vmatpush2.bf16.msra.mxu0 %v1263
  %1928 = vmatprep.mubr.bf16.mxu0 %v1614
  %1929 = vmatmul.mubr.bf16.gmra.mxu0 %v1613
  %v1930 = vpop.f32.mrf.mxu0
  %v1931 = vadd.f32 0.0, %v1930
  %v1932 = vpop.f32.mrf.mxu0
  %v1933 = vpop.f32.mrf.mxu0
  %v1934 = vadd.f32 0.0, %v1933
  %v1935 = vpop.f32.mrf.mxu0
  %1936 = vmatprep.mubr.bf16.mxu0 %v1618
  %1937 = vmatmul.mubr.bf16.gmra.mxu0 %v1617
  %v1938 = vpop.f32.mrf.mxu0
  %v1939 = vadd.f32 0.0, %v1938
  %v1940 = vpop.f32.mrf.mxu0
  %v1941 = vpop.f32.mrf.mxu0
  %v1942 = vadd.f32 0.0, %v1941
  %v1943 = vpop.f32.mrf.mxu0
  %1944 = vmatprep.mubr.bf16.mxu0 %v1622
  %1945 = vmatmul.mubr.bf16.gmra.mxu0 %v1621
  %v1946 = vpop.f32.mrf.mxu0
  %v1947 = vadd.f32 0.0, %v1946
  %v1948 = vpop.f32.mrf.mxu0
  %v1949 = vpop.f32.mrf.mxu0
  %v1950 = vadd.f32 0.0, %v1949
  %v1951 = vpop.f32.mrf.mxu0
  %1952 = vmatprep.mubr.bf16.mxu0 %v1626
  %1953 = vmatmul.mubr.bf16.gmra.mxu0 %v1625
  %v1954 = vpop.f32.mrf.mxu0
  %v1955 = vadd.f32 0.0, %v1954
  %v1956 = vpop.f32.mrf.mxu0
  %v1957 = vpop.f32.mrf.mxu0
  %v1958 = vadd.f32 0.0, %v1957
  %v1959 = vpop.f32.mrf.mxu0
  %1960 = vmatprep.mubr.bf16.mxu0 %v1630
  %1961 = vmatmul.mubr.bf16.gmra.mxu0 %v1629
  %v1962 = vpop.f32.mrf.mxu0
  %v1963 = vadd.f32 0.0, %v1962
  %v1964 = vpop.f32.mrf.mxu0
  %v1965 = vpop.f32.mrf.mxu0
  %v1966 = vadd.f32 0.0, %v1965
  %v1967 = vpop.f32.mrf.mxu0
  %1968 = vmatprep.mubr.bf16.mxu0 %v1634
  %1969 = vmatmul.mubr.bf16.gmra.mxu0 %v1633
  %v1970 = vpop.f32.mrf.mxu0
  %v1971 = vadd.f32 0.0, %v1970
  %v1972 = vpop.f32.mrf.mxu0
  %v1973 = vpop.f32.mrf.mxu0
  %v1974 = vadd.f32 0.0, %v1973
  %v1975 = vpop.f32.mrf.mxu0
  %1976 = vmatprep.mubr.bf16.mxu0 %v1638
  %1977 = vmatmul.mubr.bf16.gmra.mxu0 %v1637
  %v1978 = vpop.f32.mrf.mxu0
  %v1979 = vadd.f32 0.0, %v1978
  %v1980 = vpop.f32.mrf.mxu0
  %v1981 = vpop.f32.mrf.mxu0
  %v1982 = vadd.f32 0.0, %v1981
  %v1983 = vpop.f32.mrf.mxu0
  %1984 = vmatprep.mubr.bf16.mxu0 %v1642
  %1985 = vmatmul.mubr.bf16.gmra.mxu0 %v1641
  %v1986 = vpop.f32.mrf.mxu0
  %v1987 = vadd.f32 0.0, %v1986
  %v1988 = vpop.f32.mrf.mxu0
  %v1989 = vpop.f32.mrf.mxu0
  %v1990 = vadd.f32 0.0, %v1989
  %v1991 = vpop.f32.mrf.mxu0
  %1992 = vmatprep.mubr.bf16.mxu0 %v1646
  %1993 = vmatmul.mubr.bf16.gmra.mxu0 %v1645
  %v1994 = vpop.f32.mrf.mxu0
  %v1995 = vadd.f32 0.0, %v1994
  %v1996 = vpop.f32.mrf.mxu0
  %v1997 = vpop.f32.mrf.mxu0
  %v1998 = vadd.f32 0.0, %v1997
  %v1999 = vpop.f32.mrf.mxu0
  %2000 = vmatprep.mubr.bf16.mxu0 %v1650
  %2001 = vmatmul.mubr.bf16.gmra.mxu0 %v1649
  %v2002 = vpop.f32.mrf.mxu0
  %v2003 = vadd.f32 0.0, %v2002
  %v2004 = vpop.f32.mrf.mxu0
  %v2005 = vpop.f32.mrf.mxu0
  %v2006 = vadd.f32 0.0, %v2005
  %v2007 = vpop.f32.mrf.mxu0
  %2008 = vmatprep.mubr.bf16.mxu0 %v1654
  %2009 = vmatmul.mubr.bf16.gmra.mxu0 %v1653
  %v2010 = vpop.f32.mrf.mxu0
  %v2011 = vadd.f32 0.0, %v2010
  %v2012 = vpop.f32.mrf.mxu0
  %v2013 = vpop.f32.mrf.mxu0
  %v2014 = vadd.f32 0.0, %v2013
  %v2015 = vpop.f32.mrf.mxu0
  %2016 = vmatprep.mubr.bf16.mxu0 %v1658
  %2017 = vmatmul.mubr.bf16.gmra.mxu0 %v1657
  %v2018 = vpop.f32.mrf.mxu0
  %v2019 = vadd.f32 0.0, %v2018
  %v2020 = vpop.f32.mrf.mxu0
  %v2021 = vpop.f32.mrf.mxu0
  %v2022 = vadd.f32 0.0, %v2021
  %v2023 = vpop.f32.mrf.mxu0
  %2024 = vmatprep.mubr.bf16.mxu0 %v1662
  %2025 = vmatmul.mubr.bf16.gmra.mxu0 %v1661
  %v2026 = vpop.f32.mrf.mxu0
  %v2027 = vadd.f32 0.0, %v2026
  %v2028 = vpop.f32.mrf.mxu0
  %v2029 = vpop.f32.mrf.mxu0
  %v2030 = vadd.f32 0.0, %v2029
  %v2031 = vpop.f32.mrf.mxu0
  %2032 = vmatprep.mubr.bf16.mxu0 %v1666
  %2033 = vmatmul.mubr.bf16.gmra.mxu0 %v1665
  %v2034 = vpop.f32.mrf.mxu0
  %v2035 = vadd.f32 0.0, %v2034
  %v2036 = vpop.f32.mrf.mxu0
  %v2037 = vpop.f32.mrf.mxu0
  %v2038 = vadd.f32 0.0, %v2037
  %v2039 = vpop.f32.mrf.mxu0
  %2040 = vmatprep.mubr.bf16.mxu0 %v1670
  %2041 = vmatmul.mubr.bf16.gmra.mxu0 %v1669
  %v2042 = vpop.f32.mrf.mxu0
  %v2043 = vadd.f32 0.0, %v2042
  %v2044 = vpop.f32.mrf.mxu0
  %v2045 = vpop.f32.mrf.mxu0
  %v2046 = vadd.f32 0.0, %v2045
  %v2047 = vpop.f32.mrf.mxu0
  %2048 = vmatprep.mubr.bf16.mxu0 %v1674
  %2049 = vmatmul.mubr.bf16.gmra.mxu0 %v1673
  %v2050 = vpop.f32.mrf.mxu0
  %v2051 = vadd.f32 0.0, %v2050
  %v2052 = vpop.f32.mrf.mxu0
  %v2053 = vpop.f32.mrf.mxu0
  %v2054 = vadd.f32 0.0, %v2053
  %v2055 = vpop.f32.mrf.mxu0
  %2056 = vmatprep.mubr.bf16.mxu0 %v1678
  %2057 = vmatmul.mubr.bf16.gmra.mxu0 %v1677
  %v2058 = vpop.f32.mrf.mxu0
  %v2059 = vadd.f32 0.0, %v2058
  %v2060 = vpop.f32.mrf.mxu0
  %v2061 = vpop.f32.mrf.mxu0
  %v2062 = vadd.f32 0.0, %v2061
  %v2063 = vpop.f32.mrf.mxu0
  %2064 = vmatprep.mubr.bf16.mxu0 %v1682
  %2065 = vmatmul.mubr.bf16.gmra.mxu0 %v1681
  %v2066 = vpop.f32.mrf.mxu0
  %v2067 = vadd.f32 0.0, %v2066
  %v2068 = vpop.f32.mrf.mxu0
  %v2069 = vpop.f32.mrf.mxu0
  %v2070 = vadd.f32 0.0, %v2069
  %v2071 = vpop.f32.mrf.mxu0
  %2072 = vmatprep.mubr.bf16.mxu0 %v1686
  %2073 = vmatmul.mubr.bf16.gmra.mxu0 %v1685
  %v2074 = vpop.f32.mrf.mxu0
  %v2075 = vadd.f32 0.0, %v2074
  %v2076 = vpop.f32.mrf.mxu0
  %v2077 = vpop.f32.mrf.mxu0
  %v2078 = vadd.f32 0.0, %v2077
  %v2079 = vpop.f32.mrf.mxu0
  %2080 = vmatprep.mubr.bf16.mxu0 %v1690
  %2081 = vmatmul.mubr.bf16.gmra.mxu0 %v1689
  %v2082 = vpop.f32.mrf.mxu0
  %v2083 = vadd.f32 0.0, %v2082
  %v2084 = vpop.f32.mrf.mxu0
  %v2085 = vpop.f32.mrf.mxu0
  %v2086 = vadd.f32 0.0, %v2085
  %v2087 = vpop.f32.mrf.mxu0
  %2088 = vmatprep.mubr.bf16.mxu0 %v1694
  %2089 = vmatmul.mubr.bf16.gmra.mxu0 %v1693
  %v2090 = vpop.f32.mrf.mxu0
  %v2091 = vadd.f32 0.0, %v2090
  %v2092 = vpop.f32.mrf.mxu0
  %v2093 = vpop.f32.mrf.mxu0
  %v2094 = vadd.f32 0.0, %v2093
  %v2095 = vpop.f32.mrf.mxu0
  %2096 = vmatprep.mubr.bf16.mxu0 %v1698
  %2097 = vmatmul.mubr.bf16.gmra.mxu0 %v1697
  %v2098 = vpop.f32.mrf.mxu0
  %v2099 = vadd.f32 0.0, %v2098
  %v2100 = vpop.f32.mrf.mxu0
  %v2101 = vpop.f32.mrf.mxu0
  %v2102 = vadd.f32 0.0, %v2101
  %v2103 = vpop.f32.mrf.mxu0
  %2104 = vmatprep.mubr.bf16.mxu0 %v1702
  %2105 = vmatmul.mubr.bf16.gmra.mxu0 %v1701
  %v2106 = vpop.f32.mrf.mxu0
  %v2107 = vadd.f32 0.0, %v2106
  %v2108 = vpop.f32.mrf.mxu0
  %v2109 = vpop.f32.mrf.mxu0
  %v2110 = vadd.f32 0.0, %v2109
  %v2111 = vpop.f32.mrf.mxu0
  %2112 = vmatprep.mubr.bf16.mxu0 %v1706
  %2113 = vmatmul.mubr.bf16.gmra.mxu0 %v1705
  %v2114 = vpop.f32.mrf.mxu0
  %v2115 = vadd.f32 0.0, %v2114
  %v2116 = vpop.f32.mrf.mxu0
  %v2117 = vpop.f32.mrf.mxu0
  %v2118 = vadd.f32 0.0, %v2117
  %v2119 = vpop.f32.mrf.mxu0
  %2120 = vmatprep.mubr.bf16.mxu0 %v1710
  %2121 = vmatmul.mubr.bf16.gmra.mxu0 %v1709
  %v2122 = vpop.f32.mrf.mxu0
  %v2123 = vadd.f32 0.0, %v2122
  %v2124 = vpop.f32.mrf.mxu0
  %v2125 = vpop.f32.mrf.mxu0
  %v2126 = vadd.f32 0.0, %v2125
  %v2127 = vpop.f32.mrf.mxu0
  %2128 = vmatprep.mubr.bf16.mxu0 %v1714
  %2129 = vmatmul.mubr.bf16.gmra.mxu0 %v1713
  %v2130 = vpop.f32.mrf.mxu0
  %v2131 = vadd.f32 0.0, %v2130
  %v2132 = vpop.f32.mrf.mxu0
  %v2133 = vpop.f32.mrf.mxu0
  %v2134 = vadd.f32 0.0, %v2133
  %v2135 = vpop.f32.mrf.mxu0
  %2136 = vmatprep.mubr.bf16.mxu0 %v1718
  %2137 = vmatmul.mubr.bf16.gmra.mxu0 %v1717
  %v2138 = vpop.f32.mrf.mxu0
  %v2139 = vadd.f32 0.0, %v2138
  %v2140 = vpop.f32.mrf.mxu0
  %v2141 = vpop.f32.mrf.mxu0
  %v2142 = vadd.f32 0.0, %v2141
  %v2143 = vpop.f32.mrf.mxu0
  %2144 = vmatprep.mubr.bf16.mxu0 %v1722
  %2145 = vmatmul.mubr.bf16.gmra.mxu0 %v1721
  %v2146 = vpop.f32.mrf.mxu0
  %v2147 = vadd.f32 0.0, %v2146
  %v2148 = vpop.f32.mrf.mxu0
  %v2149 = vpop.f32.mrf.mxu0
  %v2150 = vpop.f32.mrf.mxu0
  %2151 = vdwg.mxu0
  %2152 = vmatprep.subr.bf16.mxu0 0
  %2153 = vmatpush1.bf16.msra.mxu0 %v1278
  %2154 = vmatprep.subr.bf16.mxu0 0
  %2155 = vmatpush1.bf16.msra.mxu0 %v1277
  %2156 = vmatprep.subr.bf16.mxu0 0
  %2157 = vmatpush1.bf16.msra.mxu0 %v1276
  %2158 = vmatprep.subr.bf16.mxu0 0
  %2159 = vmatpush1.bf16.msra.mxu0 %v1275
  %2160 = vmatprep.subr.bf16.mxu0 0
  %2161 = vmatpush1.bf16.msra.mxu0 %v1274
  %2162 = vmatprep.subr.bf16.mxu0 0
  %2163 = vmatpush1.bf16.msra.mxu0 %v1273
  %2164 = vmatprep.subr.bf16.mxu0 0
  %2165 = vmatpush1.bf16.msra.mxu0 %v1272
  %2166 = vmatprep.subr.bf16.mxu0 0
  %2167 = vmatpush1.bf16.msra.mxu0 %v1271
  %2168 = vmatprep.subr.bf16.mxu0 0
  %2169 = vmatpush2.bf16.msra.mxu0 0
  %2170 = vmatprep.subr.bf16.mxu0 0
  %2171 = vmatpush2.bf16.msra.mxu0 0
  %2172 = vmatprep.subr.bf16.mxu0 0
  %2173 = vmatpush2.bf16.msra.mxu0 0
  %2174 = vmatprep.subr.bf16.mxu0 0
  %2175 = vmatpush2.bf16.msra.mxu0 0
  %2176 = vmatprep.subr.bf16.mxu0 0
  %2177 = vmatpush2.bf16.msra.mxu0 %v1894
  %2178 = vmatprep.subr.bf16.mxu0 0
  %2179 = vmatpush2.bf16.msra.mxu0 %v1281
  %2180 = vmatprep.subr.bf16.mxu0 0
  %2181 = vmatpush2.bf16.msra.mxu0 %v1280
  %2182 = vmatprep.subr.bf16.mxu0 0
  %2183 = vmatpush2.bf16.msra.mxu0 %v1279
  %2184 = vmatprep.mubr.bf16.mxu0 %v1810
  %2185 = vmatmul.mubr.bf16.gmra.mxu0 %v1615
  %v2186 = vpop.f32.mrf.mxu0
  %v2187 = vadd.f32 %v1931, %v2186
  %v2188 = vpop.f32.mrf.mxu0
  %v2189 = vpop.f32.mrf.mxu0
  %v2190 = vadd.f32 %v1934, %v2189
  %v2191 = vpop.f32.mrf.mxu0
  %2192 = vmatprep.mubr.bf16.mxu0 %v1813
  %2193 = vmatmul.mubr.bf16.gmra.mxu0 %v1619
  %v2194 = vpop.f32.mrf.mxu0
  %v2195 = vadd.f32 %v1939, %v2194
  %v2196 = vpop.f32.mrf.mxu0
  %v2197 = vpop.f32.mrf.mxu0
  %v2198 = vadd.f32 %v1942, %v2197
  %v2199 = vpop.f32.mrf.mxu0
  %2200 = vmatprep.mubr.bf16.mxu0 %v1816
  %2201 = vmatmul.mubr.bf16.gmra.mxu0 %v1623
  %v2202 = vpop.f32.mrf.mxu0
  %v2203 = vadd.f32 %v1947, %v2202
  %v2204 = vpop.f32.mrf.mxu0
  %v2205 = vpop.f32.mrf.mxu0
  %v2206 = vadd.f32 %v1950, %v2205
  %v2207 = vpop.f32.mrf.mxu0
  %2208 = vmatprep.mubr.bf16.mxu0 %v1819
  %2209 = vmatmul.mubr.bf16.gmra.mxu0 %v1627
  %v2210 = vpop.f32.mrf.mxu0
  %v2211 = vadd.f32 %v1955, %v2210
  %v2212 = vpop.f32.mrf.mxu0
  %v2213 = vpop.f32.mrf.mxu0
  %v2214 = vadd.f32 %v1958, %v2213
  %v2215 = vpop.f32.mrf.mxu0
  %2216 = vmatprep.mubr.bf16.mxu0 %v1822
  %2217 = vmatmul.mubr.bf16.gmra.mxu0 %v1631
  %v2218 = vpop.f32.mrf.mxu0
  %v2219 = vadd.f32 %v1963, %v2218
  %v2220 = vpop.f32.mrf.mxu0
  %v2221 = vpop.f32.mrf.mxu0
  %v2222 = vadd.f32 %v1966, %v2221
  %v2223 = vpop.f32.mrf.mxu0
  %2224 = vmatprep.mubr.bf16.mxu0 %v1825
  %2225 = vmatmul.mubr.bf16.gmra.mxu0 %v1635
  %v2226 = vpop.f32.mrf.mxu0
  %v2227 = vadd.f32 %v1971, %v2226
  %v2228 = vpop.f32.mrf.mxu0
  %v2229 = vpop.f32.mrf.mxu0
  %v2230 = vadd.f32 %v1974, %v2229
  %v2231 = vpop.f32.mrf.mxu0
  %2232 = vmatprep.mubr.bf16.mxu0 %v1828
  %2233 = vmatmul.mubr.bf16.gmra.mxu0 %v1639
  %v2234 = vpop.f32.mrf.mxu0
  %v2235 = vadd.f32 %v1979, %v2234
  %v2236 = vpop.f32.mrf.mxu0
  %v2237 = vpop.f32.mrf.mxu0
  %v2238 = vadd.f32 %v1982, %v2237
  %v2239 = vpop.f32.mrf.mxu0
  %2240 = vmatprep.mubr.bf16.mxu0 %v1831
  %2241 = vmatmul.mubr.bf16.gmra.mxu0 %v1643
  %v2242 = vpop.f32.mrf.mxu0
  %v2243 = vadd.f32 %v1987, %v2242
  %v2244 = vpop.f32.mrf.mxu0
  %v2245 = vpop.f32.mrf.mxu0
  %v2246 = vadd.f32 %v1990, %v2245
  %v2247 = vpop.f32.mrf.mxu0
  %2248 = vmatprep.mubr.bf16.mxu0 %v1834
  %2249 = vmatmul.mubr.bf16.gmra.mxu0 %v1647
  %v2250 = vpop.f32.mrf.mxu0
  %v2251 = vadd.f32 %v1995, %v2250
  %v2252 = vpop.f32.mrf.mxu0
  %v2253 = vpop.f32.mrf.mxu0
  %v2254 = vadd.f32 %v1998, %v2253
  %v2255 = vpop.f32.mrf.mxu0
  %2256 = vmatprep.mubr.bf16.mxu0 %v1837
  %2257 = vmatmul.mubr.bf16.gmra.mxu0 %v1651
  %v2258 = vpop.f32.mrf.mxu0
  %v2259 = vadd.f32 %v2003, %v2258
  %v2260 = vpop.f32.mrf.mxu0
  %v2261 = vpop.f32.mrf.mxu0
  %v2262 = vadd.f32 %v2006, %v2261
  %v2263 = vpop.f32.mrf.mxu0
  %2264 = vmatprep.mubr.bf16.mxu0 %v1840
  %2265 = vmatmul.mubr.bf16.gmra.mxu0 %v1655
  %v2266 = vpop.f32.mrf.mxu0
  %v2267 = vadd.f32 %v2011, %v2266
  %v2268 = vpop.f32.mrf.mxu0
  %v2269 = vpop.f32.mrf.mxu0
  %v2270 = vadd.f32 %v2014, %v2269
  %v2271 = vpop.f32.mrf.mxu0
  %2272 = vmatprep.mubr.bf16.mxu0 %v1843
  %2273 = vmatmul.mubr.bf16.gmra.mxu0 %v1659
  %v2274 = vpop.f32.mrf.mxu0
  %v2275 = vadd.f32 %v2019, %v2274
  %v2276 = vpop.f32.mrf.mxu0
  %v2277 = vpop.f32.mrf.mxu0
  %v2278 = vadd.f32 %v2022, %v2277
  %v2279 = vpop.f32.mrf.mxu0
  %2280 = vmatprep.mubr.bf16.mxu0 %v1846
  %2281 = vmatmul.mubr.bf16.gmra.mxu0 %v1663
  %v2282 = vpop.f32.mrf.mxu0
  %v2283 = vadd.f32 %v2027, %v2282
  %v2284 = vpop.f32.mrf.mxu0
  %v2285 = vpop.f32.mrf.mxu0
  %v2286 = vadd.f32 %v2030, %v2285
  %v2287 = vpop.f32.mrf.mxu0
  %2288 = vmatprep.mubr.bf16.mxu0 %v1849
  %2289 = vmatmul.mubr.bf16.gmra.mxu0 %v1667
  %v2290 = vpop.f32.mrf.mxu0
  %v2291 = vadd.f32 %v2035, %v2290
  %v2292 = vpop.f32.mrf.mxu0
  %v2293 = vpop.f32.mrf.mxu0
  %v2294 = vadd.f32 %v2038, %v2293
  %v2295 = vpop.f32.mrf.mxu0
  %2296 = vmatprep.mubr.bf16.mxu0 %v1852
  %2297 = vmatmul.mubr.bf16.gmra.mxu0 %v1671
  %v2298 = vpop.f32.mrf.mxu0
  %v2299 = vadd.f32 %v2043, %v2298
  %v2300 = vpop.f32.mrf.mxu0
  %v2301 = vpop.f32.mrf.mxu0
  %v2302 = vadd.f32 %v2046, %v2301
  %v2303 = vpop.f32.mrf.mxu0
  %2304 = vmatprep.mubr.bf16.mxu0 %v1855
  %2305 = vmatmul.mubr.bf16.gmra.mxu0 %v1675
  %v2306 = vpop.f32.mrf.mxu0
  %v2307 = vadd.f32 %v2051, %v2306
  %v2308 = vpop.f32.mrf.mxu0
  %v2309 = vpop.f32.mrf.mxu0
  %v2310 = vadd.f32 %v2054, %v2309
  %v2311 = vpop.f32.mrf.mxu0
  %2312 = vmatprep.mubr.bf16.mxu0 %v1858
  %2313 = vmatmul.mubr.bf16.gmra.mxu0 %v1679
  %v2314 = vpop.f32.mrf.mxu0
  %v2315 = vadd.f32 %v2059, %v2314
  %v2316 = vpop.f32.mrf.mxu0
  %v2317 = vpop.f32.mrf.mxu0
  %v2318 = vadd.f32 %v2062, %v2317
  %v2319 = vpop.f32.mrf.mxu0
  %2320 = vmatprep.mubr.bf16.mxu0 %v1861
  %2321 = vmatmul.mubr.bf16.gmra.mxu0 %v1683
  %v2322 = vpop.f32.mrf.mxu0
  %v2323 = vadd.f32 %v2067, %v2322
  %v2324 = vpop.f32.mrf.mxu0
  %v2325 = vpop.f32.mrf.mxu0
  %v2326 = vadd.f32 %v2070, %v2325
  %v2327 = vpop.f32.mrf.mxu0
  %2328 = vmatprep.mubr.bf16.mxu0 %v1864
  %2329 = vmatmul.mubr.bf16.gmra.mxu0 %v1687
  %v2330 = vpop.f32.mrf.mxu0
  %v2331 = vadd.f32 %v2075, %v2330
  %v2332 = vpop.f32.mrf.mxu0
  %v2333 = vpop.f32.mrf.mxu0
  %v2334 = vadd.f32 %v2078, %v2333
  %v2335 = vpop.f32.mrf.mxu0
  %2336 = vmatprep.mubr.bf16.mxu0 %v1867
  %2337 = vmatmul.mubr.bf16.gmra.mxu0 %v1691
  %v2338 = vpop.f32.mrf.mxu0
  %v2339 = vadd.f32 %v2083, %v2338
  %v2340 = vpop.f32.mrf.mxu0
  %v2341 = vpop.f32.mrf.mxu0
  %v2342 = vadd.f32 %v2086, %v2341
  %v2343 = vpop.f32.mrf.mxu0
  %2344 = vmatprep.mubr.bf16.mxu0 %v1870
  %2345 = vmatmul.mubr.bf16.gmra.mxu0 %v1695
  %v2346 = vpop.f32.mrf.mxu0
  %v2347 = vadd.f32 %v2091, %v2346
  %v2348 = vpop.f32.mrf.mxu0
  %v2349 = vpop.f32.mrf.mxu0
  %v2350 = vadd.f32 %v2094, %v2349
  %v2351 = vpop.f32.mrf.mxu0
  %2352 = vmatprep.mubr.bf16.mxu0 %v1873
  %2353 = vmatmul.mubr.bf16.gmra.mxu0 %v1699
  %v2354 = vpop.f32.mrf.mxu0
  %v2355 = vadd.f32 %v2099, %v2354
  %v2356 = vpop.f32.mrf.mxu0
  %v2357 = vpop.f32.mrf.mxu0
  %v2358 = vadd.f32 %v2102, %v2357
  %v2359 = vpop.f32.mrf.mxu0
  %2360 = vmatprep.mubr.bf16.mxu0 %v1876
  %2361 = vmatmul.mubr.bf16.gmra.mxu0 %v1703
  %v2362 = vpop.f32.mrf.mxu0
  %v2363 = vadd.f32 %v2107, %v2362
  %v2364 = vpop.f32.mrf.mxu0
  %v2365 = vpop.f32.mrf.mxu0
  %v2366 = vadd.f32 %v2110, %v2365
  %v2367 = vpop.f32.mrf.mxu0
  %2368 = vmatprep.mubr.bf16.mxu0 %v1879
  %2369 = vmatmul.mubr.bf16.gmra.mxu0 %v1707
  %v2370 = vpop.f32.mrf.mxu0
  %v2371 = vadd.f32 %v2115, %v2370
  %v2372 = vpop.f32.mrf.mxu0
  %v2373 = vpop.f32.mrf.mxu0
  %v2374 = vadd.f32 %v2118, %v2373
  %v2375 = vpop.f32.mrf.mxu0
  %2376 = vmatprep.mubr.bf16.mxu0 %v1882
  %2377 = vmatmul.mubr.bf16.gmra.mxu0 %v1711
  %v2378 = vpop.f32.mrf.mxu0
  %v2379 = vadd.f32 %v2123, %v2378
  %v2380 = vpop.f32.mrf.mxu0
  %v2381 = vpop.f32.mrf.mxu0
  %v2382 = vadd.f32 %v2126, %v2381
  %v2383 = vpop.f32.mrf.mxu0
  %2384 = vmatprep.mubr.bf16.mxu0 %v1885
  %2385 = vmatmul.mubr.bf16.gmra.mxu0 %v1715
  %v2386 = vpop.f32.mrf.mxu0
  %v2387 = vadd.f32 %v2131, %v2386
  %v2388 = vpop.f32.mrf.mxu0
  %v2389 = vpop.f32.mrf.mxu0
  %v2390 = vadd.f32 %v2134, %v2389
  %v2391 = vpop.f32.mrf.mxu0
  %2392 = vmatprep.mubr.bf16.mxu0 %v1888
  %2393 = vmatmul.mubr.bf16.gmra.mxu0 %v1719
  %v2394 = vpop.f32.mrf.mxu0
  %v2395 = vadd.f32 %v2139, %v2394
  %v2396 = vpop.f32.mrf.mxu0
  %v2397 = vpop.f32.mrf.mxu0
  %v2398 = vadd.f32 %v2142, %v2397
  %v2399 = vpop.f32.mrf.mxu0
  %2400 = vmatprep.mubr.bf16.mxu0 %v1891
  %2401 = vmatmul.mubr.bf16.gmra.mxu0 %v1723
  %v2402 = vpop.f32.mrf.mxu0
  %v2403 = vadd.f32 %v2147, %v2402
  %v2404 = vpop.f32.mrf.mxu0
  %v2405 = vpop.f32.mrf.mxu0
  %v2406 = vpop.f32.mrf.mxu0
  %2407 = vdwg.mxu0
  %vm2408 = vcmask 400384
  %2409 = vst.msk [vmem:[%s7] sm:$0xff] %vm2408, %v2187
  %2410 = vst.msk [vmem:[%s7 + $0x8] sm:$0xff] %vm2408, %v2190
  %2411 = vst.msk [vmem:[%s7 + $0x10] sm:$0xff] %vm2408, %v2195
  %2412 = vst.msk [vmem:[%s7 + $0x18] sm:$0xff] %vm2408, %v2198
  %2413 = vst.msk [vmem:[%s7 + $0x20] sm:$0xff] %vm2408, %v2203
  %2414 = vst.msk [vmem:[%s7 + $0x28] sm:$0xff] %vm2408, %v2206
  %2415 = vst.msk [vmem:[%s7 + $0x30] sm:$0xff] %vm2408, %v2211
  %2416 = vst.msk [vmem:[%s7 + $0x38] sm:$0xff] %vm2408, %v2214
  %2417 = vst.msk [vmem:[%s7 + $0x40] sm:$0xff] %vm2408, %v2219
  %2418 = vst.msk [vmem:[%s7 + $0x48] sm:$0xff] %vm2408, %v2222
  %2419 = vst.msk [vmem:[%s7 + $0x50] sm:$0xff] %vm2408, %v2227
  %2420 = vst.msk [vmem:[%s7 + $0x58] sm:$0xff] %vm2408, %v2230
  %2421 = vst.msk [vmem:[%s7 + $0x60] sm:$0xff] %vm2408, %v2235
  %2422 = vst.msk [vmem:[%s7 + $0x68] sm:$0xff] %vm2408, %v2238
  %2423 = vst.msk [vmem:[%s7 + $0x70] sm:$0xff] %vm2408, %v2243
  %2424 = vst.msk [vmem:[%s7 + $0x78] sm:$0xff] %vm2408, %v2246
  %2425 = vst.msk [vmem:[%s7 + $0x80] sm:$0xff] %vm2408, %v2251
  %2426 = vst.msk [vmem:[%s7 + $0x88] sm:$0xff] %vm2408, %v2254
  %2427 = vst.msk [vmem:[%s7 + $0x90] sm:$0xff] %vm2408, %v2259
  %2428 = vst.msk [vmem:[%s7 + $0x98] sm:$0xff] %vm2408, %v2262
  %2429 = vst.msk [vmem:[%s7 + $0xa0] sm:$0xff] %vm2408, %v2267
  %2430 = vst.msk [vmem:[%s7 + $0xa8] sm:$0xff] %vm2408, %v2270
  %2431 = vst.msk [vmem:[%s7 + $0xb0] sm:$0xff] %vm2408, %v2275
  %2432 = vst.msk [vmem:[%s7 + $0xb8] sm:$0xff] %vm2408, %v2278
  %2433 = vst.msk [vmem:[%s7 + $0xc0] sm:$0xff] %vm2408, %v2283
  %2434 = vst.msk [vmem:[%s7 + $0xc8] sm:$0xff] %vm2408, %v2286
  %2435 = vst.msk [vmem:[%s7 + $0xd0] sm:$0xff] %vm2408, %v2291
  %2436 = vst.msk [vmem:[%s7 + $0xd8] sm:$0xff] %vm2408, %v2294
  %2437 = vst.msk [vmem:[%s7 + $0xe0] sm:$0xff] %vm2408, %v2299
  %2438 = vst.msk [vmem:[%s7 + $0xe8] sm:$0xff] %vm2408, %v2302
  %2439 = vst.msk [vmem:[%s7 + $0xf0] sm:$0xff] %vm2408, %v2307
  %2440 = vst.msk [vmem:[%s7 + $0xf8] sm:$0xff] %vm2408, %v2310
  %2441 = vst.msk [vmem:[%s7 + $0x100] sm:$0xff] %vm2408, %v2315
  %2442 = vst.msk [vmem:[%s7 + $0x108] sm:$0xff] %vm2408, %v2318
  %2443 = vst.msk [vmem:[%s7 + $0x110] sm:$0xff] %vm2408, %v2323
  %2444 = vst.msk [vmem:[%s7 + $0x118] sm:$0xff] %vm2408, %v2326
  %2445 = vst.msk [vmem:[%s7 + $0x120] sm:$0xff] %vm2408, %v2331
  %2446 = vst.msk [vmem:[%s7 + $0x128] sm:$0xff] %vm2408, %v2334
  %2447 = vst.msk [vmem:[%s7 + $0x130] sm:$0xff] %vm2408, %v2339
  %2448 = vst.msk [vmem:[%s7 + $0x138] sm:$0xff] %vm2408, %v2342
  %2449 = vst.msk [vmem:[%s7 + $0x140] sm:$0xff] %vm2408, %v2347
  %2450 = vst.msk [vmem:[%s7 + $0x148] sm:$0xff] %vm2408, %v2350
  %2451 = vst.msk [vmem:[%s7 + $0x150] sm:$0xff] %vm2408, %v2355
  %2452 = vst.msk [vmem:[%s7 + $0x158] sm:$0xff] %vm2408, %v2358
  %2453 = vst.msk [vmem:[%s7 + $0x160] sm:$0xff] %vm2408, %v2363
  %2454 = vst.msk [vmem:[%s7 + $0x168] sm:$0xff] %vm2408, %v2366
  %2455 = vst.msk [vmem:[%s7 + $0x170] sm:$0xff] %vm2408, %v2371
  %2456 = vst.msk [vmem:[%s7 + $0x178] sm:$0xff] %vm2408, %v2374
  %2457 = vst.msk [vmem:[%s7 + $0x180] sm:$0xff] %vm2408, %v2379
  %2458 = vst.msk [vmem:[%s7 + $0x188] sm:$0xff] %vm2408, %v2382
  %2459 = vst.msk [vmem:[%s7 + $0x190] sm:$0xff] %vm2408, %v2387
  %2460 = vst.msk [vmem:[%s7 + $0x198] sm:$0xff] %vm2408, %v2390
  %2461 = vst.msk [vmem:[%s7 + $0x1a0] sm:$0xff] %vm2408, %v2395
  %2462 = vst.msk [vmem:[%s7 + $0x1a8] sm:$0xff] %vm2408, %v2398
  %2463 = vst.msk [vmem:[%s7 + $0x1b0] sm:$0xff] %vm2408, %v2403
  // Predicated region
  $region60: #{tpu_custom_call.1} parent=0 // pred_check
    _
  $region61: #{tpu_custom_call.1} parent=0 // pred_check_branch
    %2465 = sbr.rel (0) target = $region63
  $region62: #{tpu_custom_call.1} parent=0 // pred_region
    _
  $region63: #{tpu_custom_call.1} parent=0 // pred_fallthru
    _
  // Predicated region
  $region64: #{tpu_custom_call.1} parent=0 // pred_check
    _
  $region65: #{tpu_custom_call.1} parent=0 // pred_check_branch
    %2467 = sbr.rel (0) target = $region67
  $region66: #{tpu_custom_call.1} parent=0 // pred_region
    _
  $region67: #{tpu_custom_call.1} parent=0 // pred_fallthru
    _
  %2468 = vsyncmov [#allocation3]
  %s2469 = vpop.sfrf %2468
  %p2470 = scmp.eq.s32.totalorder %s2469, 0
  %p2471 = pneg %p2470
  %2473 = shalt.err (%p2471)

</llo_original>
